<compile_context>
chip_gen: v5e
topology: v5e:2x2
jax: 0.10.0
libtpu: 0.0.40
codegen_flags: <defaults>
</compile_context>

<pallas_src>
import jax
import jax.numpy as jnp
from jax.experimental import pallas as pl
from jax.experimental.pallas import tpu as pltpu


def bilstm_kernel(x_ref, len_ref, wih_ref,
                  whh_f_ref, whh_r_ref, b_f_ref, b_r_ref,
                  fcw_f_ref, fcw_r_ref, fcb_ref,
                  out_ref):
    # x_ref:   [T*B, E]  bf16   (time-major rows, B rows per timestep)
    # wih_ref: [E, 8H]   bf16   (forward input weights | reverse input weights)
    B = len_ref.shape[0]
    TB, _E = x_ref.shape
    T = TB // B
    H = whh_f_ref.shape[0]
    G = 4 * H

    lens = len_ref[...]                                   # [B, 1] int32

    # --- one big MXU matmul: input projection for ALL steps, BOTH directions ---
    x_proj = jnp.dot(x_ref[...], wih_ref[...],
                     preferred_element_type=jnp.float32)   # [T*B, 8H] f32

    # --- hoist loop-invariant weight / bias loads (no per-step VMEM reloads) ---
    whh_f = whh_f_ref[...]                                 # [H, 4H]
    whh_r = whh_r_ref[...]
    b_f = b_f_ref[...]                                     # [1, 4H]
    b_r = b_r_ref[...]

    def gate_math(gates, c):
        # PyTorch gate order: i, f, g, o. Two full-width EUP passes, then slice.
        sig = jax.nn.sigmoid(gates)                        # [B, 4H]
        tah = jnp.tanh(gates)                              # [B, 4H]
        i_g = sig[:, 0:H]
        f_g = sig[:, H:2 * H]
        g_g = tah[:, 2 * H:3 * H]
        o_g = sig[:, 3 * H:4 * H]
        c_new = f_g * c + i_g * g_g
        h_new = o_g * jnp.tanh(c_new)
        return h_new, c_new

    zeros = jnp.zeros((B, H), jnp.float32)
    h_f, c_f, h_r, c_r = zeros, zeros, zeros, zeros

    # Fused fwd+rev recurrence, fully unrolled (static T, static row slices).
    for t in range(T):
        tr = T - 1 - t
        gates_f = (x_proj[t * B:(t + 1) * B, 0:G]
                   + jnp.dot(h_f, whh_f, preferred_element_type=jnp.float32)
                   + b_f)                                  # [B, 4H]
        gates_r = (x_proj[tr * B:(tr + 1) * B, G:2 * G]
                   + jnp.dot(h_r, whh_r, preferred_element_type=jnp.float32)
                   + b_r)
        h_f_new, c_f_new = gate_math(gates_f, c_f)
        h_r_new, c_r_new = gate_math(gates_r, c_r)

        # Packed-sequence masking: forward freezes past len[b]; reverse stays
        # zero until t == len[b]-1. Select (vselect), not float lerp.
        upd_f = t < lens                                   # [B, 1] bool
        upd_r = tr < lens
        h_f = jnp.where(upd_f, h_f_new, h_f)
        c_f = jnp.where(upd_f, c_f_new, c_f)
        h_r = jnp.where(upd_r, h_r_new, h_r)
        c_r = jnp.where(upd_r, c_r_new, c_r)

    # fc(cat([h_fwd, h_rev], 1)) + sigmoid — concat avoided by split fc weight.
    logits = (jnp.dot(h_f, fcw_f_ref[...], preferred_element_type=jnp.float32)
              + jnp.dot(h_r, fcw_r_ref[...], preferred_element_type=jnp.float32)
              + fcb_ref[...])                              # [B, 1]
    out_ref[...] = jax.nn.sigmoid(logits)


def lstm_forward(text, text_len, params):
    """text: [B, T] int32 token ids; text_len: [B] int32 valid lengths."""
    B, T = text.shape
    B_pad = ((B + 7) // 8) * 8                             # f32 sublane multiple

    emb = params["embedding"][text]                        # [B, T, E] gather (glue)
    x = jnp.transpose(emb, (1, 0, 2)).astype(jnp.float32)  # [T, B, E] time-major
    if B_pad != B:
        x = jnp.pad(x, ((0, 0), (0, B_pad - B), (0, 0)))
    E = x.shape[-1]
    # Flatten time into rows so the kernel does one [T*B, E] x [E, 8H] matmul.
    x2d = x.reshape(T * B_pad, E).astype(jnp.bfloat16)     # bf16 MXU operand

    lens = text_len.astype(jnp.int32)
    if B_pad != B:
        lens = jnp.pad(lens, (0, B_pad - B))               # padded rows: len = 0
    lens = lens.reshape(B_pad, 1)

    # Both directions' input weights side by side -> single projection matmul.
    wih = jnp.concatenate([params["wih_f"], params["wih_r"]],
                          axis=1).astype(jnp.bfloat16)     # [E, 8H]

    vmem = pl.BlockSpec(memory_space=pltpu.MemorySpace.VMEM)
    out = pl.pallas_call(
        bilstm_kernel,
        out_shape=jax.ShapeDtypeStruct((B_pad, 1), jnp.float32),
        in_specs=[vmem] * 10,
        out_specs=vmem,
    )(x2d, lens, wih,
      params["whh_f"], params["whh_r"], params["b_f"], params["b_r"],
      params["fcw_f"], params["fcw_r"], params["fcb"])
    return jnp.squeeze(out[:B], axis=1)                    # [B]


def init_params(key, vocab=100, emb_dim=300, hidden=32):
    ks = jax.random.split(key, 11)
    H = hidden
    k = 1.0 / float(jnp.sqrt(jnp.float32(H)))

    def u(kk, shape):
        return jax.random.uniform(kk, shape, jnp.float32, -k, k)

    embedding = jax.random.normal(ks[0], (vocab, emb_dim), jnp.float32)

    wih_f = u(ks[1], (emb_dim, 4 * H))        # W_ih (forward), stored transposed
    whh_f = u(ks[2], (H, 4 * H))              # W_hh (forward), stored transposed
    b_f = u(ks[3], (1, 4 * H)) + u(ks[4], (1, 4 * H))   # b_ih + b_hh

    wih_r = u(ks[5], (emb_dim, 4 * H))
    whh_r = u(ks[6], (H, 4 * H))
    b_r = u(ks[7], (1, 4 * H)) + u(ks[8], (1, 4 * H))

    kf = 1.0 / float(jnp.sqrt(jnp.float32(2 * H)))
    fcw = jax.random.uniform(ks[9], (2 * H, 1), jnp.float32, -kf, kf)
    fcb = jax.random.uniform(ks[10], (1, 1), jnp.float32, -kf, kf)

    return dict(embedding=embedding,
                wih_f=wih_f, whh_f=whh_f, b_f=b_f,
                wih_r=wih_r, whh_r=whh_r, b_r=b_r,
                fcw_f=fcw[:H], fcw_r=fcw[H:], fcb=fcb)


if __name__ == "__main__":
    VOCAB, EMB, HIDDEN = 100, 300, 32
    B, T = 4, 8

    key = jax.random.PRNGKey(0)
    kp, kt = jax.random.split(key)
    params = init_params(kp, vocab=VOCAB, emb_dim=EMB, hidden=HIDDEN)

    text = jax.random.randint(kt, (B, T), 0, VOCAB, dtype=jnp.int32)
    text_len = jnp.array([8, 5, 3, 6], dtype=jnp.int32)

    out = lstm_forward(text, text_len, params)
    jax.block_until_ready(out)
    assert out.shape == (B,)
    print("KERNEL_OK")
</pallas_src>

<mosaic_0001>
module attributes {stable_mosaic.version = 11 : i64} {
  func.func @bilstm_kernel(%arg0: memref<64x300xbf16, #tpu.memory_space<vmem>>, %arg1: memref<8x1xi32, #tpu.memory_space<vmem>>, %arg2: memref<300x256xbf16, #tpu.memory_space<vmem>>, %arg3: memref<32x128xf32, #tpu.memory_space<vmem>>, %arg4: memref<32x128xf32, #tpu.memory_space<vmem>>, %arg5: memref<1x128xf32, #tpu.memory_space<vmem>>, %arg6: memref<1x128xf32, #tpu.memory_space<vmem>>, %arg7: memref<32x1xf32, #tpu.memory_space<vmem>>, %arg8: memref<32x1xf32, #tpu.memory_space<vmem>>, %arg9: memref<1x1xf32, #tpu.memory_space<vmem>>, %arg10: memref<8x1xf32, #tpu.memory_space<vmem>>) attributes {dimension_semantics = [], scalar_prefetch = 0 : i64, scratch_operands = 0 : i64, tpu.core_type = #tpu.core_type<tc>} {
    %c0 = arith.constant 0 : index
    %c0_0 = arith.constant 0 : index
    %0 = vector.load %arg1[%c0, %c0_0] : memref<8x1xi32, #tpu.memory_space<vmem>>, vector<8x1xi32>
    %c0_1 = arith.constant 0 : index
    %c0_2 = arith.constant 0 : index
    %1 = vector.load %arg0[%c0_1, %c0_2] : memref<64x300xbf16, #tpu.memory_space<vmem>>, vector<64x300xbf16>
    %c0_3 = arith.constant 0 : index
    %c0_4 = arith.constant 0 : index
    %2 = vector.load %arg2[%c0_3, %c0_4] : memref<300x256xbf16, #tpu.memory_space<vmem>>, vector<300x256xbf16>
    %cst = arith.constant dense<0.000000e+00> : vector<64x256xf32>
    %3 = tpu.matmul %1, %2, %cst {dimension_numbers = #tpu.dot_dimension_numbers<[1], [0], [0], [1], [0, 0, 1, 1], [], []>} : vector<64x300xbf16>, vector<300x256xbf16>, vector<64x256xf32> -> vector<64x256xf32>
    %c0_5 = arith.constant 0 : index
    %c0_6 = arith.constant 0 : index
    %4 = vector.load %arg3[%c0_5, %c0_6] : memref<32x128xf32, #tpu.memory_space<vmem>>, vector<32x128xf32>
    %c0_7 = arith.constant 0 : index
    %c0_8 = arith.constant 0 : index
    %5 = vector.load %arg4[%c0_7, %c0_8] : memref<32x128xf32, #tpu.memory_space<vmem>>, vector<32x128xf32>
    %c0_9 = arith.constant 0 : index
    %c0_10 = arith.constant 0 : index
    %6 = vector.load %arg5[%c0_9, %c0_10] : memref<1x128xf32, #tpu.memory_space<vmem>>, vector<1x128xf32>
    %c0_11 = arith.constant 0 : index
    %c0_12 = arith.constant 0 : index
    %7 = vector.load %arg6[%c0_11, %c0_12] : memref<1x128xf32, #tpu.memory_space<vmem>>, vector<1x128xf32>
    %cst_13 = arith.constant 0.000000e+00 : f32
    %8 = vector.broadcast %cst_13 : f32 to vector<8x32xf32>
    %9 = vector.extract_strided_slice %3 {offsets = [0, 0], sizes = [8, 128], strides = [1, 1]} : vector<64x256xf32> to vector<8x128xf32>
    %cst_14 = arith.constant dense<0.000000e+00> : vector<8x128xf32>
    %10 = tpu.matmul %8, %4, %cst_14 {dimension_numbers = #tpu.dot_dimension_numbers<[1], [0], [0], [1], [0, 0, 1, 1], [], []>} : vector<8x32xf32>, vector<32x128xf32>, vector<8x128xf32> -> vector<8x128xf32>
    %11 = arith.addf %9, %10 : vector<8x128xf32>
    %12 = vector.broadcast %6 : vector<1x128xf32> to vector<8x128xf32>
    %13 = arith.addf %11, %12 : vector<8x128xf32>
    %14 = vector.extract_strided_slice %3 {offsets = [56, 128], sizes = [8, 128], strides = [1, 1]} : vector<64x256xf32> to vector<8x128xf32>
    %cst_15 = arith.constant dense<0.000000e+00> : vector<8x128xf32>
    %15 = tpu.matmul %8, %5, %cst_15 {dimension_numbers = #tpu.dot_dimension_numbers<[1], [0], [0], [1], [0, 0, 1, 1], [], []>} : vector<8x32xf32>, vector<32x128xf32>, vector<8x128xf32> -> vector<8x128xf32>
    %16 = arith.addf %14, %15 : vector<8x128xf32>
    %17 = vector.broadcast %7 : vector<1x128xf32> to vector<8x128xf32>
    %18 = arith.addf %16, %17 : vector<8x128xf32>
    %19 = arith.negf %13 : vector<8x128xf32>
    %20 = math.exp %19 : vector<8x128xf32>
    %cst_16 = arith.constant 1.000000e+00 : f32
    %21 = vector.broadcast %cst_16 : f32 to vector<8x128xf32>
    %22 = arith.addf %21, %20 : vector<8x128xf32>
    %23 = arith.divf %21, %22 : vector<8x128xf32>
    %24 = math.tanh %13 : vector<8x128xf32>
    %25 = vector.extract_strided_slice %23 {offsets = [0, 0], sizes = [8, 32], strides = [1, 1]} : vector<8x128xf32> to vector<8x32xf32>
    %26 = vector.extract_strided_slice %23 {offsets = [0, 32], sizes = [8, 32], strides = [1, 1]} : vector<8x128xf32> to vector<8x32xf32>
    %27 = vector.extract_strided_slice %24 {offsets = [0, 64], sizes = [8, 32], strides = [1, 1]} : vector<8x128xf32> to vector<8x32xf32>
    %28 = vector.extract_strided_slice %23 {offsets = [0, 96], sizes = [8, 32], strides = [1, 1]} : vector<8x128xf32> to vector<8x32xf32>
    %29 = arith.mulf %26, %8 : vector<8x32xf32>
    %30 = arith.mulf %25, %27 : vector<8x32xf32>
    %31 = arith.addf %29, %30 : vector<8x32xf32>
    %32 = math.tanh %31 : vector<8x32xf32>
    %33 = arith.mulf %28, %32 : vector<8x32xf32>
    %34 = arith.negf %18 : vector<8x128xf32>
    %35 = math.exp %34 : vector<8x128xf32>
    %cst_17 = arith.constant 1.000000e+00 : f32
    %36 = vector.broadcast %cst_17 : f32 to vector<8x128xf32>
    %37 = arith.addf %36, %35 : vector<8x128xf32>
    %38 = arith.divf %36, %37 : vector<8x128xf32>
    %39 = math.tanh %18 : vector<8x128xf32>
    %40 = vector.extract_strided_slice %38 {offsets = [0, 0], sizes = [8, 32], strides = [1, 1]} : vector<8x128xf32> to vector<8x32xf32>
    %41 = vector.extract_strided_slice %38 {offsets = [0, 32], sizes = [8, 32], strides = [1, 1]} : vector<8x128xf32> to vector<8x32xf32>
    %42 = vector.extract_strided_slice %39 {offsets = [0, 64], sizes = [8, 32], strides = [1, 1]} : vector<8x128xf32> to vector<8x32xf32>
    %43 = vector.extract_strided_slice %38 {offsets = [0, 96], sizes = [8, 32], strides = [1, 1]} : vector<8x128xf32> to vector<8x32xf32>
    %44 = arith.mulf %41, %8 : vector<8x32xf32>
    %45 = arith.mulf %40, %42 : vector<8x32xf32>
    %46 = arith.addf %44, %45 : vector<8x32xf32>
    %47 = math.tanh %46 : vector<8x32xf32>
    %48 = arith.mulf %43, %47 : vector<8x32xf32>
    %c0_i32 = arith.constant 0 : i32
    %49 = vector.broadcast %c0_i32 : i32 to vector<8x1xi32>
    %50 = arith.cmpi sgt, %0, %49 : vector<8x1xi32>
    %c7_i32 = arith.constant 7 : i32
    %51 = vector.broadcast %c7_i32 : i32 to vector<8x1xi32>
    %52 = arith.cmpi sgt, %0, %51 : vector<8x1xi32>
    %53 = vector.shape_cast %50 : vector<8x1xi1> to vector<8x1xi1>
    %54 = vector.broadcast %53 : vector<8x1xi1> to vector<8x32xi1>
    %55 = arith.select %54, %33, %8 : vector<8x32xi1>, vector<8x32xf32>
    %56 = vector.shape_cast %50 : vector<8x1xi1> to vector<8x1xi1>
    %57 = vector.broadcast %56 : vector<8x1xi1> to vector<8x32xi1>
    %58 = arith.select %57, %31, %8 : vector<8x32xi1>, vector<8x32xf32>
    %59 = vector.shape_cast %52 : vector<8x1xi1> to vector<8x1xi1>
    %60 = vector.broadcast %59 : vector<8x1xi1> to vector<8x32xi1>
    %61 = arith.select %60, %48, %8 : vector<8x32xi1>, vector<8x32xf32>
    %62 = vector.shape_cast %52 : vector<8x1xi1> to vector<8x1xi1>
    %63 = vector.broadcast %62 : vector<8x1xi1> to vector<8x32xi1>
    %64 = arith.select %63, %46, %8 : vector<8x32xi1>, vector<8x32xf32>
    %65 = vector.extract_strided_slice %3 {offsets = [8, 0], sizes = [8, 128], strides = [1, 1]} : vector<64x256xf32> to vector<8x128xf32>
    %cst_18 = arith.constant dense<0.000000e+00> : vector<8x128xf32>
    %66 = tpu.matmul %55, %4, %cst_18 {dimension_numbers = #tpu.dot_dimension_numbers<[1], [0], [0], [1], [0, 0, 1, 1], [], []>} : vector<8x32xf32>, vector<32x128xf32>, vector<8x128xf32> -> vector<8x128xf32>
    %67 = arith.addf %65, %66 : vector<8x128xf32>
    %68 = vector.broadcast %6 : vector<1x128xf32> to vector<8x128xf32>
    %69 = arith.addf %67, %68 : vector<8x128xf32>
    %70 = vector.extract_strided_slice %3 {offsets = [48, 128], sizes = [8, 128], strides = [1, 1]} : vector<64x256xf32> to vector<8x128xf32>
    %cst_19 = arith.constant dense<0.000000e+00> : vector<8x128xf32>
    %71 = tpu.matmul %61, %5, %cst_19 {dimension_numbers = #tpu.dot_dimension_numbers<[1], [0], [0], [1], [0, 0, 1, 1], [], []>} : vector<8x32xf32>, vector<32x128xf32>, vector<8x128xf32> -> vector<8x128xf32>
    %72 = arith.addf %70, %71 : vector<8x128xf32>
    %73 = vector.broadcast %7 : vector<1x128xf32> to vector<8x128xf32>
    %74 = arith.addf %72, %73 : vector<8x128xf32>
    %75 = arith.negf %69 : vector<8x128xf32>
    %76 = math.exp %75 : vector<8x128xf32>
    %cst_20 = arith.constant 1.000000e+00 : f32
    %77 = vector.broadcast %cst_20 : f32 to vector<8x128xf32>
    %78 = arith.addf %77, %76 : vector<8x128xf32>
    %79 = arith.divf %77, %78 : vector<8x128xf32>
    %80 = math.tanh %69 : vector<8x128xf32>
    %81 = vector.extract_strided_slice %79 {offsets = [0, 0], sizes = [8, 32], strides = [1, 1]} : vector<8x128xf32> to vector<8x32xf32>
    %82 = vector.extract_strided_slice %79 {offsets = [0, 32], sizes = [8, 32], strides = [1, 1]} : vector<8x128xf32> to vector<8x32xf32>
    %83 = vector.extract_strided_slice %80 {offsets = [0, 64], sizes = [8, 32], strides = [1, 1]} : vector<8x128xf32> to vector<8x32xf32>
    %84 = vector.extract_strided_slice %79 {offsets = [0, 96], sizes = [8, 32], strides = [1, 1]} : vector<8x128xf32> to vector<8x32xf32>
    %85 = arith.mulf %82, %58 : vector<8x32xf32>
    %86 = arith.mulf %81, %83 : vector<8x32xf32>
    %87 = arith.addf %85, %86 : vector<8x32xf32>
    %88 = math.tanh %87 : vector<8x32xf32>
    %89 = arith.mulf %84, %88 : vector<8x32xf32>
    %90 = arith.negf %74 : vector<8x128xf32>
    %91 = math.exp %90 : vector<8x128xf32>
    %cst_21 = arith.constant 1.000000e+00 : f32
    %92 = vector.broadcast %cst_21 : f32 to vector<8x128xf32>
    %93 = arith.addf %92, %91 : vector<8x128xf32>
    %94 = arith.divf %92, %93 : vector<8x128xf32>
    %95 = math.tanh %74 : vector<8x128xf32>
    %96 = vector.extract_strided_slice %94 {offsets = [0, 0], sizes = [8, 32], strides = [1, 1]} : vector<8x128xf32> to vector<8x32xf32>
    %97 = vector.extract_strided_slice %94 {offsets = [0, 32], sizes = [8, 32], strides = [1, 1]} : vector<8x128xf32> to vector<8x32xf32>
    %98 = vector.extract_strided_slice %95 {offsets = [0, 64], sizes = [8, 32], strides = [1, 1]} : vector<8x128xf32> to vector<8x32xf32>
    %99 = vector.extract_strided_slice %94 {offsets = [0, 96], sizes = [8, 32], strides = [1, 1]} : vector<8x128xf32> to vector<8x32xf32>
    %100 = arith.mulf %97, %64 : vector<8x32xf32>
    %101 = arith.mulf %96, %98 : vector<8x32xf32>
    %102 = arith.addf %100, %101 : vector<8x32xf32>
    %103 = math.tanh %102 : vector<8x32xf32>
    %104 = arith.mulf %99, %103 : vector<8x32xf32>
    %c1_i32 = arith.constant 1 : i32
    %105 = vector.broadcast %c1_i32 : i32 to vector<8x1xi32>
    %106 = arith.cmpi sgt, %0, %105 : vector<8x1xi32>
    %c6_i32 = arith.constant 6 : i32
    %107 = vector.broadcast %c6_i32 : i32 to vector<8x1xi32>
    %108 = arith.cmpi sgt, %0, %107 : vector<8x1xi32>
    %109 = vector.shape_cast %106 : vector<8x1xi1> to vector<8x1xi1>
    %110 = vector.broadcast %109 : vector<8x1xi1> to vector<8x32xi1>
    %111 = arith.select %110, %89, %55 : vector<8x32xi1>, vector<8x32xf32>
    %112 = vector.shape_cast %106 : vector<8x1xi1> to vector<8x1xi1>
    %113 = vector.broadcast %112 : vector<8x1xi1> to vector<8x32xi1>
    %114 = arith.select %113, %87, %58 : vector<8x32xi1>, vector<8x32xf32>
    %115 = vector.shape_cast %108 : vector<8x1xi1> to vector<8x1xi1>
    %116 = vector.broadcast %115 : vector<8x1xi1> to vector<8x32xi1>
    %117 = arith.select %116, %104, %61 : vector<8x32xi1>, vector<8x32xf32>
    %118 = vector.shape_cast %108 : vector<8x1xi1> to vector<8x1xi1>
    %119 = vector.broadcast %118 : vector<8x1xi1> to vector<8x32xi1>
    %120 = arith.select %119, %102, %64 : vector<8x32xi1>, vector<8x32xf32>
    %121 = vector.extract_strided_slice %3 {offsets = [16, 0], sizes = [8, 128], strides = [1, 1]} : vector<64x256xf32> to vector<8x128xf32>
    %cst_22 = arith.constant dense<0.000000e+00> : vector<8x128xf32>
    %122 = tpu.matmul %111, %4, %cst_22 {dimension_numbers = #tpu.dot_dimension_numbers<[1], [0], [0], [1], [0, 0, 1, 1], [], []>} : vector<8x32xf32>, vector<32x128xf32>, vector<8x128xf32> -> vector<8x128xf32>
    %123 = arith.addf %121, %122 : vector<8x128xf32>
    %124 = vector.broadcast %6 : vector<1x128xf32> to vector<8x128xf32>
    %125 = arith.addf %123, %124 : vector<8x128xf32>
    %126 = vector.extract_strided_slice %3 {offsets = [40, 128], sizes = [8, 128], strides = [1, 1]} : vector<64x256xf32> to vector<8x128xf32>
    %cst_23 = arith.constant dense<0.000000e+00> : vector<8x128xf32>
    %127 = tpu.matmul %117, %5, %cst_23 {dimension_numbers = #tpu.dot_dimension_numbers<[1], [0], [0], [1], [0, 0, 1, 1], [], []>} : vector<8x32xf32>, vector<32x128xf32>, vector<8x128xf32> -> vector<8x128xf32>
    %128 = arith.addf %126, %127 : vector<8x128xf32>
    %129 = vector.broadcast %7 : vector<1x128xf32> to vector<8x128xf32>
    %130 = arith.addf %128, %129 : vector<8x128xf32>
    %131 = arith.negf %125 : vector<8x128xf32>
    %132 = math.exp %131 : vector<8x128xf32>
    %cst_24 = arith.constant 1.000000e+00 : f32
    %133 = vector.broadcast %cst_24 : f32 to vector<8x128xf32>
    %134 = arith.addf %133, %132 : vector<8x128xf32>
    %135 = arith.divf %133, %134 : vector<8x128xf32>
    %136 = math.tanh %125 : vector<8x128xf32>
    %137 = vector.extract_strided_slice %135 {offsets = [0, 0], sizes = [8, 32], strides = [1, 1]} : vector<8x128xf32> to vector<8x32xf32>
    %138 = vector.extract_strided_slice %135 {offsets = [0, 32], sizes = [8, 32], strides = [1, 1]} : vector<8x128xf32> to vector<8x32xf32>
    %139 = vector.extract_strided_slice %136 {offsets = [0, 64], sizes = [8, 32], strides = [1, 1]} : vector<8x128xf32> to vector<8x32xf32>
    %140 = vector.extract_strided_slice %135 {offsets = [0, 96], sizes = [8, 32], strides = [1, 1]} : vector<8x128xf32> to vector<8x32xf32>
    %141 = arith.mulf %138, %114 : vector<8x32xf32>
    %142 = arith.mulf %137, %139 : vector<8x32xf32>
    %143 = arith.addf %141, %142 : vector<8x32xf32>
    %144 = math.tanh %143 : vector<8x32xf32>
    %145 = arith.mulf %140, %144 : vector<8x32xf32>
    %146 = arith.negf %130 : vector<8x128xf32>
    %147 = math.exp %146 : vector<8x128xf32>
    %cst_25 = arith.constant 1.000000e+00 : f32
    %148 = vector.broadcast %cst_25 : f32 to vector<8x128xf32>
    %149 = arith.addf %148, %147 : vector<8x128xf32>
    %150 = arith.divf %148, %149 : vector<8x128xf32>
    %151 = math.tanh %130 : vector<8x128xf32>
    %152 = vector.extract_strided_slice %150 {offsets = [0, 0], sizes = [8, 32], strides = [1, 1]} : vector<8x128xf32> to vector<8x32xf32>
    %153 = vector.extract_strided_slice %150 {offsets = [0, 32], sizes = [8, 32], strides = [1, 1]} : vector<8x128xf32> to vector<8x32xf32>
    %154 = vector.extract_strided_slice %151 {offsets = [0, 64], sizes = [8, 32], strides = [1, 1]} : vector<8x128xf32> to vector<8x32xf32>
    %155 = vector.extract_strided_slice %150 {offsets = [0, 96], sizes = [8, 32], strides = [1, 1]} : vector<8x128xf32> to vector<8x32xf32>
    %156 = arith.mulf %153, %120 : vector<8x32xf32>
    %157 = arith.mulf %152, %154 : vector<8x32xf32>
    %158 = arith.addf %156, %157 : vector<8x32xf32>
    %159 = math.tanh %158 : vector<8x32xf32>
    %160 = arith.mulf %155, %159 : vector<8x32xf32>
    %c2_i32 = arith.constant 2 : i32
    %161 = vector.broadcast %c2_i32 : i32 to vector<8x1xi32>
    %162 = arith.cmpi sgt, %0, %161 : vector<8x1xi32>
    %c5_i32 = arith.constant 5 : i32
    %163 = vector.broadcast %c5_i32 : i32 to vector<8x1xi32>
    %164 = arith.cmpi sgt, %0, %163 : vector<8x1xi32>
    %165 = vector.shape_cast %162 : vector<8x1xi1> to vector<8x1xi1>
    %166 = vector.broadcast %165 : vector<8x1xi1> to vector<8x32xi1>
    %167 = arith.select %166, %145, %111 : vector<8x32xi1>, vector<8x32xf32>
    %168 = vector.shape_cast %162 : vector<8x1xi1> to vector<8x1xi1>
    %169 = vector.broadcast %168 : vector<8x1xi1> to vector<8x32xi1>
    %170 = arith.select %169, %143, %114 : vector<8x32xi1>, vector<8x32xf32>
    %171 = vector.shape_cast %164 : vector<8x1xi1> to vector<8x1xi1>
    %172 = vector.broadcast %171 : vector<8x1xi1> to vector<8x32xi1>
    %173 = arith.select %172, %160, %117 : vector<8x32xi1>, vector<8x32xf32>
    %174 = vector.shape_cast %164 : vector<8x1xi1> to vector<8x1xi1>
    %175 = vector.broadcast %174 : vector<8x1xi1> to vector<8x32xi1>
    %176 = arith.select %175, %158, %120 : vector<8x32xi1>, vector<8x32xf32>
    %177 = vector.extract_strided_slice %3 {offsets = [24, 0], sizes = [8, 128], strides = [1, 1]} : vector<64x256xf32> to vector<8x128xf32>
    %cst_26 = arith.constant dense<0.000000e+00> : vector<8x128xf32>
    %178 = tpu.matmul %167, %4, %cst_26 {dimension_numbers = #tpu.dot_dimension_numbers<[1], [0], [0], [1], [0, 0, 1, 1], [], []>} : vector<8x32xf32>, vector<32x128xf32>, vector<8x128xf32> -> vector<8x128xf32>
    %179 = arith.addf %177, %178 : vector<8x128xf32>
    %180 = vector.broadcast %6 : vector<1x128xf32> to vector<8x128xf32>
    %181 = arith.addf %179, %180 : vector<8x128xf32>
    %182 = vector.extract_strided_slice %3 {offsets = [32, 128], sizes = [8, 128], strides = [1, 1]} : vector<64x256xf32> to vector<8x128xf32>
    %cst_27 = arith.constant dense<0.000000e+00> : vector<8x128xf32>
    %183 = tpu.matmul %173, %5, %cst_27 {dimension_numbers = #tpu.dot_dimension_numbers<[1], [0], [0], [1], [0, 0, 1, 1], [], []>} : vector<8x32xf32>, vector<32x128xf32>, vector<8x128xf32> -> vector<8x128xf32>
    %184 = arith.addf %182, %183 : vector<8x128xf32>
    %185 = vector.broadcast %7 : vector<1x128xf32> to vector<8x128xf32>
    %186 = arith.addf %184, %185 : vector<8x128xf32>
    %187 = arith.negf %181 : vector<8x128xf32>
    %188 = math.exp %187 : vector<8x128xf32>
    %cst_28 = arith.constant 1.000000e+00 : f32
    %189 = vector.broadcast %cst_28 : f32 to vector<8x128xf32>
    %190 = arith.addf %189, %188 : vector<8x128xf32>
    %191 = arith.divf %189, %190 : vector<8x128xf32>
    %192 = math.tanh %181 : vector<8x128xf32>
    %193 = vector.extract_strided_slice %191 {offsets = [0, 0], sizes = [8, 32], strides = [1, 1]} : vector<8x128xf32> to vector<8x32xf32>
    %194 = vector.extract_strided_slice %191 {offsets = [0, 32], sizes = [8, 32], strides = [1, 1]} : vector<8x128xf32> to vector<8x32xf32>
    %195 = vector.extract_strided_slice %192 {offsets = [0, 64], sizes = [8, 32], strides = [1, 1]} : vector<8x128xf32> to vector<8x32xf32>
    %196 = vector.extract_strided_slice %191 {offsets = [0, 96], sizes = [8, 32], strides = [1, 1]} : vector<8x128xf32> to vector<8x32xf32>
    %197 = arith.mulf %194, %170 : vector<8x32xf32>
    %198 = arith.mulf %193, %195 : vector<8x32xf32>
    %199 = arith.addf %197, %198 : vector<8x32xf32>
    %200 = math.tanh %199 : vector<8x32xf32>
    %201 = arith.mulf %196, %200 : vector<8x32xf32>
    %202 = arith.negf %186 : vector<8x128xf32>
    %203 = math.exp %202 : vector<8x128xf32>
    %cst_29 = arith.constant 1.000000e+00 : f32
    %204 = vector.broadcast %cst_29 : f32 to vector<8x128xf32>
    %205 = arith.addf %204, %203 : vector<8x128xf32>
    %206 = arith.divf %204, %205 : vector<8x128xf32>
    %207 = math.tanh %186 : vector<8x128xf32>
    %208 = vector.extract_strided_slice %206 {offsets = [0, 0], sizes = [8, 32], strides = [1, 1]} : vector<8x128xf32> to vector<8x32xf32>
    %209 = vector.extract_strided_slice %206 {offsets = [0, 32], sizes = [8, 32], strides = [1, 1]} : vector<8x128xf32> to vector<8x32xf32>
    %210 = vector.extract_strided_slice %207 {offsets = [0, 64], sizes = [8, 32], strides = [1, 1]} : vector<8x128xf32> to vector<8x32xf32>
    %211 = vector.extract_strided_slice %206 {offsets = [0, 96], sizes = [8, 32], strides = [1, 1]} : vector<8x128xf32> to vector<8x32xf32>
    %212 = arith.mulf %209, %176 : vector<8x32xf32>
    %213 = arith.mulf %208, %210 : vector<8x32xf32>
    %214 = arith.addf %212, %213 : vector<8x32xf32>
    %215 = math.tanh %214 : vector<8x32xf32>
    %216 = arith.mulf %211, %215 : vector<8x32xf32>
    %c3_i32 = arith.constant 3 : i32
    %217 = vector.broadcast %c3_i32 : i32 to vector<8x1xi32>
    %218 = arith.cmpi sgt, %0, %217 : vector<8x1xi32>
    %c4_i32 = arith.constant 4 : i32
    %219 = vector.broadcast %c4_i32 : i32 to vector<8x1xi32>
    %220 = arith.cmpi sgt, %0, %219 : vector<8x1xi32>
    %221 = vector.shape_cast %218 : vector<8x1xi1> to vector<8x1xi1>
    %222 = vector.broadcast %221 : vector<8x1xi1> to vector<8x32xi1>
    %223 = arith.select %222, %201, %167 : vector<8x32xi1>, vector<8x32xf32>
    %224 = vector.shape_cast %218 : vector<8x1xi1> to vector<8x1xi1>
    %225 = vector.broadcast %224 : vector<8x1xi1> to vector<8x32xi1>
    %226 = arith.select %225, %199, %170 : vector<8x32xi1>, vector<8x32xf32>
    %227 = vector.shape_cast %220 : vector<8x1xi1> to vector<8x1xi1>
    %228 = vector.broadcast %227 : vector<8x1xi1> to vector<8x32xi1>
    %229 = arith.select %228, %216, %173 : vector<8x32xi1>, vector<8x32xf32>
    %230 = vector.shape_cast %220 : vector<8x1xi1> to vector<8x1xi1>
    %231 = vector.broadcast %230 : vector<8x1xi1> to vector<8x32xi1>
    %232 = arith.select %231, %214, %176 : vector<8x32xi1>, vector<8x32xf32>
    %233 = vector.extract_strided_slice %3 {offsets = [32, 0], sizes = [8, 128], strides = [1, 1]} : vector<64x256xf32> to vector<8x128xf32>
    %cst_30 = arith.constant dense<0.000000e+00> : vector<8x128xf32>
    %234 = tpu.matmul %223, %4, %cst_30 {dimension_numbers = #tpu.dot_dimension_numbers<[1], [0], [0], [1], [0, 0, 1, 1], [], []>} : vector<8x32xf32>, vector<32x128xf32>, vector<8x128xf32> -> vector<8x128xf32>
    %235 = arith.addf %233, %234 : vector<8x128xf32>
    %236 = vector.broadcast %6 : vector<1x128xf32> to vector<8x128xf32>
    %237 = arith.addf %235, %236 : vector<8x128xf32>
    %238 = vector.extract_strided_slice %3 {offsets = [24, 128], sizes = [8, 128], strides = [1, 1]} : vector<64x256xf32> to vector<8x128xf32>
    %cst_31 = arith.constant dense<0.000000e+00> : vector<8x128xf32>
    %239 = tpu.matmul %229, %5, %cst_31 {dimension_numbers = #tpu.dot_dimension_numbers<[1], [0], [0], [1], [0, 0, 1, 1], [], []>} : vector<8x32xf32>, vector<32x128xf32>, vector<8x128xf32> -> vector<8x128xf32>
    %240 = arith.addf %238, %239 : vector<8x128xf32>
    %241 = vector.broadcast %7 : vector<1x128xf32> to vector<8x128xf32>
    %242 = arith.addf %240, %241 : vector<8x128xf32>
    %243 = arith.negf %237 : vector<8x128xf32>
    %244 = math.exp %243 : vector<8x128xf32>
    %cst_32 = arith.constant 1.000000e+00 : f32
    %245 = vector.broadcast %cst_32 : f32 to vector<8x128xf32>
    %246 = arith.addf %245, %244 : vector<8x128xf32>
    %247 = arith.divf %245, %246 : vector<8x128xf32>
    %248 = math.tanh %237 : vector<8x128xf32>
    %249 = vector.extract_strided_slice %247 {offsets = [0, 0], sizes = [8, 32], strides = [1, 1]} : vector<8x128xf32> to vector<8x32xf32>
    %250 = vector.extract_strided_slice %247 {offsets = [0, 32], sizes = [8, 32], strides = [1, 1]} : vector<8x128xf32> to vector<8x32xf32>
    %251 = vector.extract_strided_slice %248 {offsets = [0, 64], sizes = [8, 32], strides = [1, 1]} : vector<8x128xf32> to vector<8x32xf32>
    %252 = vector.extract_strided_slice %247 {offsets = [0, 96], sizes = [8, 32], strides = [1, 1]} : vector<8x128xf32> to vector<8x32xf32>
    %253 = arith.mulf %250, %226 : vector<8x32xf32>
    %254 = arith.mulf %249, %251 : vector<8x32xf32>
    %255 = arith.addf %253, %254 : vector<8x32xf32>
    %256 = math.tanh %255 : vector<8x32xf32>
    %257 = arith.mulf %252, %256 : vector<8x32xf32>
    %258 = arith.negf %242 : vector<8x128xf32>
    %259 = math.exp %258 : vector<8x128xf32>
    %cst_33 = arith.constant 1.000000e+00 : f32
    %260 = vector.broadcast %cst_33 : f32 to vector<8x128xf32>
    %261 = arith.addf %260, %259 : vector<8x128xf32>
    %262 = arith.divf %260, %261 : vector<8x128xf32>
    %263 = math.tanh %242 : vector<8x128xf32>
    %264 = vector.extract_strided_slice %262 {offsets = [0, 0], sizes = [8, 32], strides = [1, 1]} : vector<8x128xf32> to vector<8x32xf32>
    %265 = vector.extract_strided_slice %262 {offsets = [0, 32], sizes = [8, 32], strides = [1, 1]} : vector<8x128xf32> to vector<8x32xf32>
    %266 = vector.extract_strided_slice %263 {offsets = [0, 64], sizes = [8, 32], strides = [1, 1]} : vector<8x128xf32> to vector<8x32xf32>
    %267 = vector.extract_strided_slice %262 {offsets = [0, 96], sizes = [8, 32], strides = [1, 1]} : vector<8x128xf32> to vector<8x32xf32>
    %268 = arith.mulf %265, %232 : vector<8x32xf32>
    %269 = arith.mulf %264, %266 : vector<8x32xf32>
    %270 = arith.addf %268, %269 : vector<8x32xf32>
    %271 = math.tanh %270 : vector<8x32xf32>
    %272 = arith.mulf %267, %271 : vector<8x32xf32>
    %c4_i32_34 = arith.constant 4 : i32
    %273 = vector.broadcast %c4_i32_34 : i32 to vector<8x1xi32>
    %274 = arith.cmpi sgt, %0, %273 : vector<8x1xi32>
    %c3_i32_35 = arith.constant 3 : i32
    %275 = vector.broadcast %c3_i32_35 : i32 to vector<8x1xi32>
    %276 = arith.cmpi sgt, %0, %275 : vector<8x1xi32>
    %277 = vector.shape_cast %274 : vector<8x1xi1> to vector<8x1xi1>
    %278 = vector.broadcast %277 : vector<8x1xi1> to vector<8x32xi1>
    %279 = arith.select %278, %257, %223 : vector<8x32xi1>, vector<8x32xf32>
    %280 = vector.shape_cast %274 : vector<8x1xi1> to vector<8x1xi1>
    %281 = vector.broadcast %280 : vector<8x1xi1> to vector<8x32xi1>
    %282 = arith.select %281, %255, %226 : vector<8x32xi1>, vector<8x32xf32>
    %283 = vector.shape_cast %276 : vector<8x1xi1> to vector<8x1xi1>
    %284 = vector.broadcast %283 : vector<8x1xi1> to vector<8x32xi1>
    %285 = arith.select %284, %272, %229 : vector<8x32xi1>, vector<8x32xf32>
    %286 = vector.shape_cast %276 : vector<8x1xi1> to vector<8x1xi1>
    %287 = vector.broadcast %286 : vector<8x1xi1> to vector<8x32xi1>
    %288 = arith.select %287, %270, %232 : vector<8x32xi1>, vector<8x32xf32>
    %289 = vector.extract_strided_slice %3 {offsets = [40, 0], sizes = [8, 128], strides = [1, 1]} : vector<64x256xf32> to vector<8x128xf32>
    %cst_36 = arith.constant dense<0.000000e+00> : vector<8x128xf32>
    %290 = tpu.matmul %279, %4, %cst_36 {dimension_numbers = #tpu.dot_dimension_numbers<[1], [0], [0], [1], [0, 0, 1, 1], [], []>} : vector<8x32xf32>, vector<32x128xf32>, vector<8x128xf32> -> vector<8x128xf32>
    %291 = arith.addf %289, %290 : vector<8x128xf32>
    %292 = vector.broadcast %6 : vector<1x128xf32> to vector<8x128xf32>
    %293 = arith.addf %291, %292 : vector<8x128xf32>
    %294 = vector.extract_strided_slice %3 {offsets = [16, 128], sizes = [8, 128], strides = [1, 1]} : vector<64x256xf32> to vector<8x128xf32>
    %cst_37 = arith.constant dense<0.000000e+00> : vector<8x128xf32>
    %295 = tpu.matmul %285, %5, %cst_37 {dimension_numbers = #tpu.dot_dimension_numbers<[1], [0], [0], [1], [0, 0, 1, 1], [], []>} : vector<8x32xf32>, vector<32x128xf32>, vector<8x128xf32> -> vector<8x128xf32>
    %296 = arith.addf %294, %295 : vector<8x128xf32>
    %297 = vector.broadcast %7 : vector<1x128xf32> to vector<8x128xf32>
    %298 = arith.addf %296, %297 : vector<8x128xf32>
    %299 = arith.negf %293 : vector<8x128xf32>
    %300 = math.exp %299 : vector<8x128xf32>
    %cst_38 = arith.constant 1.000000e+00 : f32
    %301 = vector.broadcast %cst_38 : f32 to vector<8x128xf32>
    %302 = arith.addf %301, %300 : vector<8x128xf32>
    %303 = arith.divf %301, %302 : vector<8x128xf32>
    %304 = math.tanh %293 : vector<8x128xf32>
    %305 = vector.extract_strided_slice %303 {offsets = [0, 0], sizes = [8, 32], strides = [1, 1]} : vector<8x128xf32> to vector<8x32xf32>
    %306 = vector.extract_strided_slice %303 {offsets = [0, 32], sizes = [8, 32], strides = [1, 1]} : vector<8x128xf32> to vector<8x32xf32>
    %307 = vector.extract_strided_slice %304 {offsets = [0, 64], sizes = [8, 32], strides = [1, 1]} : vector<8x128xf32> to vector<8x32xf32>
    %308 = vector.extract_strided_slice %303 {offsets = [0, 96], sizes = [8, 32], strides = [1, 1]} : vector<8x128xf32> to vector<8x32xf32>
    %309 = arith.mulf %306, %282 : vector<8x32xf32>
    %310 = arith.mulf %305, %307 : vector<8x32xf32>
    %311 = arith.addf %309, %310 : vector<8x32xf32>
    %312 = math.tanh %311 : vector<8x32xf32>
    %313 = arith.mulf %308, %312 : vector<8x32xf32>
    %314 = arith.negf %298 : vector<8x128xf32>
    %315 = math.exp %314 : vector<8x128xf32>
    %cst_39 = arith.constant 1.000000e+00 : f32
    %316 = vector.broadcast %cst_39 : f32 to vector<8x128xf32>
    %317 = arith.addf %316, %315 : vector<8x128xf32>
    %318 = arith.divf %316, %317 : vector<8x128xf32>
    %319 = math.tanh %298 : vector<8x128xf32>
    %320 = vector.extract_strided_slice %318 {offsets = [0, 0], sizes = [8, 32], strides = [1, 1]} : vector<8x128xf32> to vector<8x32xf32>
    %321 = vector.extract_strided_slice %318 {offsets = [0, 32], sizes = [8, 32], strides = [1, 1]} : vector<8x128xf32> to vector<8x32xf32>
    %322 = vector.extract_strided_slice %319 {offsets = [0, 64], sizes = [8, 32], strides = [1, 1]} : vector<8x128xf32> to vector<8x32xf32>
    %323 = vector.extract_strided_slice %318 {offsets = [0, 96], sizes = [8, 32], strides = [1, 1]} : vector<8x128xf32> to vector<8x32xf32>
    %324 = arith.mulf %321, %288 : vector<8x32xf32>
    %325 = arith.mulf %320, %322 : vector<8x32xf32>
    %326 = arith.addf %324, %325 : vector<8x32xf32>
    %327 = math.tanh %326 : vector<8x32xf32>
    %328 = arith.mulf %323, %327 : vector<8x32xf32>
    %c5_i32_40 = arith.constant 5 : i32
    %329 = vector.broadcast %c5_i32_40 : i32 to vector<8x1xi32>
    %330 = arith.cmpi sgt, %0, %329 : vector<8x1xi32>
    %c2_i32_41 = arith.constant 2 : i32
    %331 = vector.broadcast %c2_i32_41 : i32 to vector<8x1xi32>
    %332 = arith.cmpi sgt, %0, %331 : vector<8x1xi32>
    %333 = vector.shape_cast %330 : vector<8x1xi1> to vector<8x1xi1>
    %334 = vector.broadcast %333 : vector<8x1xi1> to vector<8x32xi1>
    %335 = arith.select %334, %313, %279 : vector<8x32xi1>, vector<8x32xf32>
    %336 = vector.shape_cast %330 : vector<8x1xi1> to vector<8x1xi1>
    %337 = vector.broadcast %336 : vector<8x1xi1> to vector<8x32xi1>
    %338 = arith.select %337, %311, %282 : vector<8x32xi1>, vector<8x32xf32>
    %339 = vector.shape_cast %332 : vector<8x1xi1> to vector<8x1xi1>
    %340 = vector.broadcast %339 : vector<8x1xi1> to vector<8x32xi1>
    %341 = arith.select %340, %328, %285 : vector<8x32xi1>, vector<8x32xf32>
    %342 = vector.shape_cast %332 : vector<8x1xi1> to vector<8x1xi1>
    %343 = vector.broadcast %342 : vector<8x1xi1> to vector<8x32xi1>
    %344 = arith.select %343, %326, %288 : vector<8x32xi1>, vector<8x32xf32>
    %345 = vector.extract_strided_slice %3 {offsets = [48, 0], sizes = [8, 128], strides = [1, 1]} : vector<64x256xf32> to vector<8x128xf32>
    %cst_42 = arith.constant dense<0.000000e+00> : vector<8x128xf32>
    %346 = tpu.matmul %335, %4, %cst_42 {dimension_numbers = #tpu.dot_dimension_numbers<[1], [0], [0], [1], [0, 0, 1, 1], [], []>} : vector<8x32xf32>, vector<32x128xf32>, vector<8x128xf32> -> vector<8x128xf32>
    %347 = arith.addf %345, %346 : vector<8x128xf32>
    %348 = vector.broadcast %6 : vector<1x128xf32> to vector<8x128xf32>
    %349 = arith.addf %347, %348 : vector<8x128xf32>
    %350 = vector.extract_strided_slice %3 {offsets = [8, 128], sizes = [8, 128], strides = [1, 1]} : vector<64x256xf32> to vector<8x128xf32>
    %cst_43 = arith.constant dense<0.000000e+00> : vector<8x128xf32>
    %351 = tpu.matmul %341, %5, %cst_43 {dimension_numbers = #tpu.dot_dimension_numbers<[1], [0], [0], [1], [0, 0, 1, 1], [], []>} : vector<8x32xf32>, vector<32x128xf32>, vector<8x128xf32> -> vector<8x128xf32>
    %352 = arith.addf %350, %351 : vector<8x128xf32>
    %353 = vector.broadcast %7 : vector<1x128xf32> to vector<8x128xf32>
    %354 = arith.addf %352, %353 : vector<8x128xf32>
    %355 = arith.negf %349 : vector<8x128xf32>
    %356 = math.exp %355 : vector<8x128xf32>
    %cst_44 = arith.constant 1.000000e+00 : f32
    %357 = vector.broadcast %cst_44 : f32 to vector<8x128xf32>
    %358 = arith.addf %357, %356 : vector<8x128xf32>
    %359 = arith.divf %357, %358 : vector<8x128xf32>
    %360 = math.tanh %349 : vector<8x128xf32>
    %361 = vector.extract_strided_slice %359 {offsets = [0, 0], sizes = [8, 32], strides = [1, 1]} : vector<8x128xf32> to vector<8x32xf32>
    %362 = vector.extract_strided_slice %359 {offsets = [0, 32], sizes = [8, 32], strides = [1, 1]} : vector<8x128xf32> to vector<8x32xf32>
    %363 = vector.extract_strided_slice %360 {offsets = [0, 64], sizes = [8, 32], strides = [1, 1]} : vector<8x128xf32> to vector<8x32xf32>
    %364 = vector.extract_strided_slice %359 {offsets = [0, 96], sizes = [8, 32], strides = [1, 1]} : vector<8x128xf32> to vector<8x32xf32>
    %365 = arith.mulf %362, %338 : vector<8x32xf32>
    %366 = arith.mulf %361, %363 : vector<8x32xf32>
    %367 = arith.addf %365, %366 : vector<8x32xf32>
    %368 = math.tanh %367 : vector<8x32xf32>
    %369 = arith.mulf %364, %368 : vector<8x32xf32>
    %370 = arith.negf %354 : vector<8x128xf32>
    %371 = math.exp %370 : vector<8x128xf32>
    %cst_45 = arith.constant 1.000000e+00 : f32
    %372 = vector.broadcast %cst_45 : f32 to vector<8x128xf32>
    %373 = arith.addf %372, %371 : vector<8x128xf32>
    %374 = arith.divf %372, %373 : vector<8x128xf32>
    %375 = math.tanh %354 : vector<8x128xf32>
    %376 = vector.extract_strided_slice %374 {offsets = [0, 0], sizes = [8, 32], strides = [1, 1]} : vector<8x128xf32> to vector<8x32xf32>
    %377 = vector.extract_strided_slice %374 {offsets = [0, 32], sizes = [8, 32], strides = [1, 1]} : vector<8x128xf32> to vector<8x32xf32>
    %378 = vector.extract_strided_slice %375 {offsets = [0, 64], sizes = [8, 32], strides = [1, 1]} : vector<8x128xf32> to vector<8x32xf32>
    %379 = vector.extract_strided_slice %374 {offsets = [0, 96], sizes = [8, 32], strides = [1, 1]} : vector<8x128xf32> to vector<8x32xf32>
    %380 = arith.mulf %377, %344 : vector<8x32xf32>
    %381 = arith.mulf %376, %378 : vector<8x32xf32>
    %382 = arith.addf %380, %381 : vector<8x32xf32>
    %383 = math.tanh %382 : vector<8x32xf32>
    %384 = arith.mulf %379, %383 : vector<8x32xf32>
    %c6_i32_46 = arith.constant 6 : i32
    %385 = vector.broadcast %c6_i32_46 : i32 to vector<8x1xi32>
    %386 = arith.cmpi sgt, %0, %385 : vector<8x1xi32>
    %c1_i32_47 = arith.constant 1 : i32
    %387 = vector.broadcast %c1_i32_47 : i32 to vector<8x1xi32>
    %388 = arith.cmpi sgt, %0, %387 : vector<8x1xi32>
    %389 = vector.shape_cast %386 : vector<8x1xi1> to vector<8x1xi1>
    %390 = vector.broadcast %389 : vector<8x1xi1> to vector<8x32xi1>
    %391 = arith.select %390, %369, %335 : vector<8x32xi1>, vector<8x32xf32>
    %392 = vector.shape_cast %386 : vector<8x1xi1> to vector<8x1xi1>
    %393 = vector.broadcast %392 : vector<8x1xi1> to vector<8x32xi1>
    %394 = arith.select %393, %367, %338 : vector<8x32xi1>, vector<8x32xf32>
    %395 = vector.shape_cast %388 : vector<8x1xi1> to vector<8x1xi1>
    %396 = vector.broadcast %395 : vector<8x1xi1> to vector<8x32xi1>
    %397 = arith.select %396, %384, %341 : vector<8x32xi1>, vector<8x32xf32>
    %398 = vector.shape_cast %388 : vector<8x1xi1> to vector<8x1xi1>
    %399 = vector.broadcast %398 : vector<8x1xi1> to vector<8x32xi1>
    %400 = arith.select %399, %382, %344 : vector<8x32xi1>, vector<8x32xf32>
    %401 = vector.extract_strided_slice %3 {offsets = [56, 0], sizes = [8, 128], strides = [1, 1]} : vector<64x256xf32> to vector<8x128xf32>
    %cst_48 = arith.constant dense<0.000000e+00> : vector<8x128xf32>
    %402 = tpu.matmul %391, %4, %cst_48 {dimension_numbers = #tpu.dot_dimension_numbers<[1], [0], [0], [1], [0, 0, 1, 1], [], []>} : vector<8x32xf32>, vector<32x128xf32>, vector<8x128xf32> -> vector<8x128xf32>
    %403 = arith.addf %401, %402 : vector<8x128xf32>
    %404 = vector.broadcast %6 : vector<1x128xf32> to vector<8x128xf32>
    %405 = arith.addf %403, %404 : vector<8x128xf32>
    %406 = vector.extract_strided_slice %3 {offsets = [0, 128], sizes = [8, 128], strides = [1, 1]} : vector<64x256xf32> to vector<8x128xf32>
    %cst_49 = arith.constant dense<0.000000e+00> : vector<8x128xf32>
    %407 = tpu.matmul %397, %5, %cst_49 {dimension_numbers = #tpu.dot_dimension_numbers<[1], [0], [0], [1], [0, 0, 1, 1], [], []>} : vector<8x32xf32>, vector<32x128xf32>, vector<8x128xf32> -> vector<8x128xf32>
    %408 = arith.addf %406, %407 : vector<8x128xf32>
    %409 = vector.broadcast %7 : vector<1x128xf32> to vector<8x128xf32>
    %410 = arith.addf %408, %409 : vector<8x128xf32>
    %411 = arith.negf %405 : vector<8x128xf32>
    %412 = math.exp %411 : vector<8x128xf32>
    %cst_50 = arith.constant 1.000000e+00 : f32
    %413 = vector.broadcast %cst_50 : f32 to vector<8x128xf32>
    %414 = arith.addf %413, %412 : vector<8x128xf32>
    %415 = arith.divf %413, %414 : vector<8x128xf32>
    %416 = math.tanh %405 : vector<8x128xf32>
    %417 = vector.extract_strided_slice %415 {offsets = [0, 0], sizes = [8, 32], strides = [1, 1]} : vector<8x128xf32> to vector<8x32xf32>
    %418 = vector.extract_strided_slice %415 {offsets = [0, 32], sizes = [8, 32], strides = [1, 1]} : vector<8x128xf32> to vector<8x32xf32>
    %419 = vector.extract_strided_slice %416 {offsets = [0, 64], sizes = [8, 32], strides = [1, 1]} : vector<8x128xf32> to vector<8x32xf32>
    %420 = vector.extract_strided_slice %415 {offsets = [0, 96], sizes = [8, 32], strides = [1, 1]} : vector<8x128xf32> to vector<8x32xf32>
    %421 = arith.mulf %418, %394 : vector<8x32xf32>
    %422 = arith.mulf %417, %419 : vector<8x32xf32>
    %423 = arith.addf %421, %422 : vector<8x32xf32>
    %424 = math.tanh %423 : vector<8x32xf32>
    %425 = arith.mulf %420, %424 : vector<8x32xf32>
    %426 = arith.negf %410 : vector<8x128xf32>
    %427 = math.exp %426 : vector<8x128xf32>
    %cst_51 = arith.constant 1.000000e+00 : f32
    %428 = vector.broadcast %cst_51 : f32 to vector<8x128xf32>
    %429 = arith.addf %428, %427 : vector<8x128xf32>
    %430 = arith.divf %428, %429 : vector<8x128xf32>
    %431 = math.tanh %410 : vector<8x128xf32>
    %432 = vector.extract_strided_slice %430 {offsets = [0, 0], sizes = [8, 32], strides = [1, 1]} : vector<8x128xf32> to vector<8x32xf32>
    %433 = vector.extract_strided_slice %430 {offsets = [0, 32], sizes = [8, 32], strides = [1, 1]} : vector<8x128xf32> to vector<8x32xf32>
    %434 = vector.extract_strided_slice %431 {offsets = [0, 64], sizes = [8, 32], strides = [1, 1]} : vector<8x128xf32> to vector<8x32xf32>
    %435 = vector.extract_strided_slice %430 {offsets = [0, 96], sizes = [8, 32], strides = [1, 1]} : vector<8x128xf32> to vector<8x32xf32>
    %436 = arith.mulf %433, %400 : vector<8x32xf32>
    %437 = arith.mulf %432, %434 : vector<8x32xf32>
    %438 = arith.addf %436, %437 : vector<8x32xf32>
    %439 = math.tanh %438 : vector<8x32xf32>
    %440 = arith.mulf %435, %439 : vector<8x32xf32>
    %c7_i32_52 = arith.constant 7 : i32
    %441 = vector.broadcast %c7_i32_52 : i32 to vector<8x1xi32>
    %442 = arith.cmpi sgt, %0, %441 : vector<8x1xi32>
    %c0_i32_53 = arith.constant 0 : i32
    %443 = vector.broadcast %c0_i32_53 : i32 to vector<8x1xi32>
    %444 = arith.cmpi sgt, %0, %443 : vector<8x1xi32>
    %445 = vector.shape_cast %442 : vector<8x1xi1> to vector<8x1xi1>
    %446 = vector.broadcast %445 : vector<8x1xi1> to vector<8x32xi1>
    %447 = arith.select %446, %425, %391 : vector<8x32xi1>, vector<8x32xf32>
    %448 = vector.shape_cast %444 : vector<8x1xi1> to vector<8x1xi1>
    %449 = vector.broadcast %448 : vector<8x1xi1> to vector<8x32xi1>
    %450 = arith.select %449, %440, %397 : vector<8x32xi1>, vector<8x32xf32>
    %c0_54 = arith.constant 0 : index
    %c0_55 = arith.constant 0 : index
    %451 = vector.load %arg7[%c0_54, %c0_55] : memref<32x1xf32, #tpu.memory_space<vmem>>, vector<32x1xf32>
    %cst_56 = arith.constant dense<0.000000e+00> : vector<8x1xf32>
    %452 = tpu.matmul %447, %451, %cst_56 {dimension_numbers = #tpu.dot_dimension_numbers<[1], [0], [0], [1], [0, 0, 1, 1], [], []>} : vector<8x32xf32>, vector<32x1xf32>, vector<8x1xf32> -> vector<8x1xf32>
    %c0_57 = arith.constant 0 : index
    %c0_58 = arith.constant 0 : index
    %453 = vector.load %arg8[%c0_57, %c0_58] : memref<32x1xf32, #tpu.memory_space<vmem>>, vector<32x1xf32>
    %cst_59 = arith.constant dense<0.000000e+00> : vector<8x1xf32>
    %454 = tpu.matmul %450, %453, %cst_59 {dimension_numbers = #tpu.dot_dimension_numbers<[1], [0], [0], [1], [0, 0, 1, 1], [], []>} : vector<8x32xf32>, vector<32x1xf32>, vector<8x1xf32> -> vector<8x1xf32>
    %455 = arith.addf %452, %454 : vector<8x1xf32>
    %c0_60 = arith.constant 0 : index
    %c0_61 = arith.constant 0 : index
    %456 = vector.load %arg9[%c0_60, %c0_61] : memref<1x1xf32, #tpu.memory_space<vmem>>, vector<1x1xf32>
    %457 = vector.broadcast %456 : vector<1x1xf32> to vector<8x1xf32>
    %458 = arith.addf %455, %457 : vector<8x1xf32>
    %459 = arith.negf %458 : vector<8x1xf32>
    %460 = math.exp %459 : vector<8x1xf32>
    %cst_62 = arith.constant 1.000000e+00 : f32
    %461 = vector.broadcast %cst_62 : f32 to vector<8x1xf32>
    %462 = arith.addf %461, %460 : vector<8x1xf32>
    %463 = arith.divf %461, %462 : vector<8x1xf32>
    %c0_63 = arith.constant 0 : index
    %c0_64 = arith.constant 0 : index
    %464 = vector.load %arg10[%c0_63, %c0_64] : memref<8x1xf32, #tpu.memory_space<vmem>>, vector<8x1xf32>
    tpu.vector_store %arg10[%c0_63, %c0_64], %463 {strides = array<i32>} : memref<8x1xf32, #tpu.memory_space<vmem>>, vector<8x1xf32>,
    return
  }
}

</mosaic_0001>

<llo_original>
// kernel: tpu_custom_call.1
$region0: #{tpu_custom_call.1}
  #allocation0 [shape = 'u32[]', space=smem, size = 0x4, offset = 0x4, fixed_abs, tag = 'smem constant byte address 0x4 - core index']
  #allocation1 [shape = 'u32[72,128]{1,0:T(1,128)}', space=vmem, size = 0x9000, scoped, tag = 'internal scratch']
  #allocation2 [shape = 'f32[1,1]{1,0:T(1,128)S(1)}', space=vmem, size = 0x200, scoped, tag = 'scoped memory for tpu_custom_call.1']
  %s0 = inlined_call_operand.hbm [shape: bf16[64,300], index: 0, kind: input, shape index: {}]
  %s1 = inlined_call_operand.vmem [shape: s32[8,1], index: 1, kind: input, shape index: {}]
  %s2 = inlined_call_operand.hbm [shape: bf16[300,256], index: 2, kind: input, shape index: {}]
  %s3 = inlined_call_operand.vmem [shape: f32[32,128], index: 3, kind: input, shape index: {}]
  %s4 = inlined_call_operand.vmem [shape: f32[32,128], index: 4, kind: input, shape index: {}]
  %s5 = inlined_call_operand.vmem [shape: f32[1,128], index: 5, kind: input, shape index: {}]
  %s6 = inlined_call_operand.vmem [shape: f32[1,128], index: 6, kind: input, shape index: {}]
  %s7 = inlined_call_operand.vmem [shape: f32[32,1], index: 7, kind: input, shape index: {}]
  %s8 = inlined_call_operand.vmem [shape: f32[32,1], index: 8, kind: input, shape index: {}]
  %s9 = inlined_call_operand.<no memory space> [shape: f32[1,1], index: 9, kind: input, shape index: {}]
  %s10 = inlined_call_operand.vmem [shape: f32[8,1], index: 10, kind: output, shape index: {}]
  %s11 = sld [smem:[#allocation0]]
  $region58: #{tpu_custom_call.1} parent=0
    _
  %s13 = ssub.s32 1, %s11
  %s14 = scalar_select 0, %s13, %s11
  %v15 = vstv %s9
  %16 = vst [vmem:[#allocation2] sm:$0x1] %v15
  $region1: #{tpu_custom_call.1} parent=0
    #allocation3 [shape = 'u8[49152]{0}', space=vmem, size = 0xc000, scoped, tag = 'input window, operand 0, single buffered']
    #allocation4 [shape = 's32[1]{0}', space=sflag, size = 0x4, scoped, tag = 'scoped memory for tpu_custom_call.1']
    #allocation5 [shape = 'u8[155648]{0}', space=vmem, size = 0x26000, scoped, tag = 'input window, operand 2, single buffered']
    #allocation6 [shape = 's32[1]{0}', space=sflag, size = 0x4, scoped, tag = 'scoped memory for tpu_custom_call.1']
    %17 = vsyncpa [#allocation4], 0
    %18 = vsyncpa [#allocation6], 0
    // Predicated region
    $region2: #{tpu_custom_call.1} parent=1 // pred_check
      _
    $region3: #{tpu_custom_call.1} parent=1 // pred_check_branch
      %20 = sbr.rel (0) target = $region5
    $region4: #{tpu_custom_call.1} parent=1 // pred_region
      %22 = vsyncadd [#allocation4], 0
      %s23 = sshll.u32 %s0, 4
      %s24 = int_to_ptr.hbm [resolvable:$true] %s23
      %s25 = sshll.u32 [#allocation3], 4
      %s26 = int_to_ptr.vmem [resolvable:$true] %s25
      %31 = dma.hbm_to_vmem [thread:$0]  %s24, 1536, %s26, [#allocation4], 192, 192, 12
    $region5: #{tpu_custom_call.1} parent=1 // pred_fallthru
      _
    // Predicated region
    $region6: #{tpu_custom_call.1} parent=1 // pred_check
      _
    $region7: #{tpu_custom_call.1} parent=1 // pred_check_branch
      %33 = sbr.rel (0) target = $region9
    $region8: #{tpu_custom_call.1} parent=1 // pred_region
      _
    $region9: #{tpu_custom_call.1} parent=1 // pred_fallthru
      _
    // Predicated region
    $region10: #{tpu_custom_call.1} parent=1 // pred_check
      _
    $region11: #{tpu_custom_call.1} parent=1 // pred_check_branch
      %35 = sbr.rel (0) target = $region13
    $region12: #{tpu_custom_call.1} parent=1 // pred_region
      %37 = vsyncadd [#allocation6], 0
      %s38 = sshll.u32 %s2, 4
      %s39 = int_to_ptr.hbm [resolvable:$true] %s38
      %s40 = sshll.u32 [#allocation5], 4
      %s41 = int_to_ptr.vmem [resolvable:$true] %s40
      %46 = dma.hbm_to_vmem [thread:$0]  %s39, 4864, %s41, [#allocation6], 128, 128, 8
    $region13: #{tpu_custom_call.1} parent=1 // pred_fallthru
      _
    // Predicated region
    $region14: #{tpu_custom_call.1} parent=1 // pred_check
      _
    $region15: #{tpu_custom_call.1} parent=1 // pred_check_branch
      %48 = sbr.rel (0) target = $region17
    $region16: #{tpu_custom_call.1} parent=1 // pred_region
      _
    $region17: #{tpu_custom_call.1} parent=1 // pred_fallthru
      _
    // Predicated region
    $region18: #{tpu_custom_call.1} parent=1 // pred_check
      _
    $region19: #{tpu_custom_call.1} parent=1 // pred_check_branch
      %50 = sbr.rel (0) target = $region21
    $region20: #{tpu_custom_call.1} parent=1 // pred_region
      _
    $region21: #{tpu_custom_call.1} parent=1 // pred_fallthru
      _
    // Predicated region
    $region22: #{tpu_custom_call.1} parent=1 // pred_check
      _
    $region23: #{tpu_custom_call.1} parent=1 // pred_check_branch
      %52 = sbr.rel (0) target = $region25
    $region24: #{tpu_custom_call.1} parent=1 // pred_region
      _
    $region25: #{tpu_custom_call.1} parent=1 // pred_fallthru
      _
    // Predicated region
    $region26: #{tpu_custom_call.1} parent=1 // pred_check
      _
    $region27: #{tpu_custom_call.1} parent=1 // pred_check_branch
      %54 = sbr.rel (0) target = $region29
    $region28: #{tpu_custom_call.1} parent=1 // pred_region
      _
    $region29: #{tpu_custom_call.1} parent=1 // pred_fallthru
      _
    // Predicated region
    $region30: #{tpu_custom_call.1} parent=1 // pred_check
      _
    $region31: #{tpu_custom_call.1} parent=1 // pred_check_branch
      %56 = sbr.rel (0) target = $region33
    $region32: #{tpu_custom_call.1} parent=1 // pred_region
      _
    $region33: #{tpu_custom_call.1} parent=1 // pred_fallthru
      _
    // Predicated region
    $region34: #{tpu_custom_call.1} parent=1 // pred_check
      _
    $region35: #{tpu_custom_call.1} parent=1 // pred_check_branch
      %58 = sbr.rel (0) target = $region37
    $region36: #{tpu_custom_call.1} parent=1 // pred_region
      _
    $region37: #{tpu_custom_call.1} parent=1 // pred_fallthru
      _
    // Predicated region
    $region38: #{tpu_custom_call.1} parent=1 // pred_check
      _
    $region39: #{tpu_custom_call.1} parent=1 // pred_check_branch
      %60 = sbr.rel (0) target = $region41
    $region40: #{tpu_custom_call.1} parent=1 // pred_region
      _
    $region41: #{tpu_custom_call.1} parent=1 // pred_fallthru
      _
    // Predicated region
    $region42: #{tpu_custom_call.1} parent=1 // pred_check
      _
    $region43: #{tpu_custom_call.1} parent=1 // pred_check_branch
      %62 = sbr.rel (0) target = $region45
    $region44: #{tpu_custom_call.1} parent=1 // pred_region
      %64 = dma.done [#allocation4], 1536
    $region45: #{tpu_custom_call.1} parent=1 // pred_fallthru
      _
    // Predicated region
    $region46: #{tpu_custom_call.1} parent=1 // pred_check
      _
    $region47: #{tpu_custom_call.1} parent=1 // pred_check_branch
      %66 = sbr.rel (0) target = $region49
    $region48: #{tpu_custom_call.1} parent=1 // pred_region
      %68 = dma.done [#allocation6], 4864
    $region49: #{tpu_custom_call.1} parent=1 // pred_fallthru
      _
    %v70 = vld [vmem:[%s1] sm:$0xff]
    %v71 = vld [vmem:[#allocation3] sm:$0xff]
    %v72 = vld [vmem:[#allocation3 + $0x8] sm:$0xf]
    %v73 = vld [vmem:[#allocation3 + $0xc] sm:$0xff]
    %v74 = vld [vmem:[#allocation3 + $0x14] sm:$0xf]
    %v75 = vld [vmem:[#allocation3 + $0x18] sm:$0xff]
    %v76 = vld [vmem:[#allocation3 + $0x20] sm:$0xf]
    %v77 = vld [vmem:[#allocation3 + $0x24] sm:$0xff]
    %v78 = vld [vmem:[#allocation3 + $0x2c] sm:$0xf]
    %v79 = vld [vmem:[#allocation3 + $0x30] sm:$0xff]
    %v80 = vld [vmem:[#allocation3 + $0x38] sm:$0xf]
    %v81 = vld [vmem:[#allocation3 + $0x3c] sm:$0xff]
    %v82 = vld [vmem:[#allocation3 + $0x44] sm:$0xf]
    %v83 = vld [vmem:[#allocation3 + $0x48] sm:$0xff]
    %v84 = vld [vmem:[#allocation3 + $0x50] sm:$0xf]
    %v85 = vld [vmem:[#allocation3 + $0x54] sm:$0xff]
    %v86 = vld [vmem:[#allocation3 + $0x5c] sm:$0xf]
    %v87 = vld [vmem:[#allocation5] sm:$0xff]
    %v88 = vld [vmem:[#allocation5 + $0x8] sm:$0xff]
    %v89 = vld [vmem:[#allocation5 + $0x10] sm:$0xff]
    %v90 = vld [vmem:[#allocation5 + $0x18] sm:$0xff]
    %v91 = vld [vmem:[#allocation5 + $0x20] sm:$0xff]
    %v92 = vld [vmem:[#allocation5 + $0x28] sm:$0xff]
    %v93 = vld [vmem:[#allocation5 + $0x30] sm:$0xff]
    %v94 = vld [vmem:[#allocation5 + $0x38] sm:$0xff]
    %v95 = vld [vmem:[#allocation5 + $0x40] sm:$0xff]
    %v96 = vld [vmem:[#allocation5 + $0x48] sm:$0xff]
    %v97 = vld [vmem:[#allocation5 + $0x50] sm:$0xff]
    %v98 = vld [vmem:[#allocation5 + $0x58] sm:$0xff]
    %v99 = vld [vmem:[#allocation5 + $0x60] sm:$0xff]
    %v100 = vld [vmem:[#allocation5 + $0x68] sm:$0xff]
    %v101 = vld [vmem:[#allocation5 + $0x70] sm:$0xff]
    %v102 = vld [vmem:[#allocation5 + $0x78] sm:$0xff]
    %v103 = vld [vmem:[#allocation5 + $0x80] sm:$0xff]
    %v104 = vld [vmem:[#allocation5 + $0x88] sm:$0xff]
    %v105 = vld [vmem:[#allocation5 + $0x90] sm:$0xff]
    %v106 = vld [vmem:[#allocation5 + $0x98] sm:$0xff]
    %v107 = vld [vmem:[#allocation5 + $0xa0] sm:$0xff]
    %v108 = vld [vmem:[#allocation5 + $0xa8] sm:$0xff]
    %v109 = vld [vmem:[#allocation5 + $0xb0] sm:$0xff]
    %v110 = vld [vmem:[#allocation5 + $0xb8] sm:$0xff]
    %v111 = vld [vmem:[#allocation5 + $0xc0] sm:$0xff]
    %v112 = vld [vmem:[#allocation5 + $0xc8] sm:$0xff]
    %v113 = vld [vmem:[#allocation5 + $0xd0] sm:$0xff]
    %v114 = vld [vmem:[#allocation5 + $0xd8] sm:$0xff]
    %v115 = vld [vmem:[#allocation5 + $0xe0] sm:$0xff]
    %v116 = vld [vmem:[#allocation5 + $0xe8] sm:$0xff]
    %v117 = vld [vmem:[#allocation5 + $0xf0] sm:$0xff]
    %v118 = vld [vmem:[#allocation5 + $0xf8] sm:$0xff]
    %v119 = vld [vmem:[#allocation5 + $0x100] sm:$0xff]
    %v120 = vld [vmem:[#allocation5 + $0x108] sm:$0xff]
    %v121 = vld [vmem:[#allocation5 + $0x110] sm:$0xff]
    %v122 = vld [vmem:[#allocation5 + $0x118] sm:$0xff]
    %v123 = vld [vmem:[#allocation5 + $0x120] sm:$0xff]
    %v124 = vld [vmem:[#allocation5 + $0x128] sm:$0x33]
    %v141 = vunpack.c.l.b16 %v71
    %v142 = vunpack.c.h.b16 %v71
    %v143 = vunpack.c.l.b16 %v72
    %v144 = vunpack.c.l.b16 %v73
    %v145 = vunpack.c.h.b16 %v73
    %v146 = vunpack.c.l.b16 %v74
    %v147 = vunpack.c.l.b16 %v75
    %v148 = vunpack.c.h.b16 %v75
    %v149 = vunpack.c.l.b16 %v76
    %v150 = vunpack.c.l.b16 %v77
    %v151 = vunpack.c.h.b16 %v77
    %v152 = vunpack.c.l.b16 %v78
    %v153 = vunpack.c.l.b16 %v79
    %v154 = vunpack.c.h.b16 %v79
    %v155 = vunpack.c.l.b16 %v80
    %v156 = vunpack.c.l.b16 %v81
    %v157 = vunpack.c.h.b16 %v81
    %v158 = vunpack.c.l.b16 %v82
    %v159 = vunpack.c.l.b16 %v83
    %v160 = vunpack.c.h.b16 %v83
    %v161 = vunpack.c.l.b16 %v84
    %v162 = vunpack.c.l.b16 %v85
    %v163 = vunpack.c.h.b16 %v85
    %v164 = vunpack.c.l.b16 %v86
    %v165 = vpack.c.b16 %v144, %v141
    %v166 = vpack.c.b16 %v145, %v142
    %v167 = vpack.c.b16 %v146, %v143
    %v168 = vpack.c.b16 %v150, %v147
    %v169 = vpack.c.b16 %v151, %v148
    %v170 = vpack.c.b16 %v152, %v149
    %v171 = vpack.c.b16 %v156, %v153
    %v172 = vpack.c.b16 %v157, %v154
    %v173 = vpack.c.b16 %v158, %v155
    %v174 = vpack.c.b16 %v162, %v159
    %v175 = vpack.c.b16 %v163, %v160
    %v176 = vpack.c.b16 %v164, %v161
    %v223 = vunpack.c.l.b16 %v87
    %v224 = vunpack.c.h.b16 %v87
    %v225 = vunpack.c.l.b16 %v88
    %v226 = vunpack.c.h.b16 %v88
    %v227 = vunpack.c.l.b16 %v89
    %v228 = vunpack.c.h.b16 %v89
    %v229 = vunpack.c.l.b16 %v90
    %v230 = vunpack.c.h.b16 %v90
    %v231 = vunpack.c.l.b16 %v91
    %v232 = vunpack.c.h.b16 %v91
    %v233 = vunpack.c.l.b16 %v92
    %v234 = vunpack.c.h.b16 %v92
    %v235 = vunpack.c.l.b16 %v93
    %v236 = vunpack.c.h.b16 %v93
    %v237 = vunpack.c.l.b16 %v94
    %v238 = vunpack.c.h.b16 %v94
    %v239 = vunpack.c.l.b16 %v95
    %v240 = vunpack.c.h.b16 %v95
    %v241 = vunpack.c.l.b16 %v96
    %v242 = vunpack.c.h.b16 %v96
    %v243 = vunpack.c.l.b16 %v97
    %v244 = vunpack.c.h.b16 %v97
    %v245 = vunpack.c.l.b16 %v98
    %v246 = vunpack.c.h.b16 %v98
    %v247 = vunpack.c.l.b16 %v99
    %v248 = vunpack.c.h.b16 %v99
    %v249 = vunpack.c.l.b16 %v100
    %v250 = vunpack.c.h.b16 %v100
    %v251 = vunpack.c.l.b16 %v101
    %v252 = vunpack.c.h.b16 %v101
    %v253 = vunpack.c.l.b16 %v102
    %v254 = vunpack.c.h.b16 %v102
    %v255 = vunpack.c.l.b16 %v103
    %v256 = vunpack.c.h.b16 %v103
    %v257 = vunpack.c.l.b16 %v104
    %v258 = vunpack.c.h.b16 %v104
    %v259 = vunpack.c.l.b16 %v105
    %v260 = vunpack.c.h.b16 %v105
    %v261 = vunpack.c.l.b16 %v106
    %v262 = vunpack.c.h.b16 %v106
    %v263 = vunpack.c.l.b16 %v107
    %v264 = vunpack.c.h.b16 %v107
    %v265 = vunpack.c.l.b16 %v108
    %v266 = vunpack.c.h.b16 %v108
    %v267 = vunpack.c.l.b16 %v109
    %v268 = vunpack.c.h.b16 %v109
    %v269 = vunpack.c.l.b16 %v110
    %v270 = vunpack.c.h.b16 %v110
    %v271 = vunpack.c.l.b16 %v111
    %v272 = vunpack.c.h.b16 %v111
    %v273 = vunpack.c.l.b16 %v112
    %v274 = vunpack.c.h.b16 %v112
    %v275 = vunpack.c.l.b16 %v113
    %v276 = vunpack.c.h.b16 %v113
    %v277 = vunpack.c.l.b16 %v114
    %v278 = vunpack.c.h.b16 %v114
    %v279 = vunpack.c.l.b16 %v115
    %v280 = vunpack.c.h.b16 %v115
    %v281 = vunpack.c.l.b16 %v116
    %v282 = vunpack.c.h.b16 %v116
    %v283 = vunpack.c.l.b16 %v117
    %v284 = vunpack.c.h.b16 %v117
    %v285 = vunpack.c.l.b16 %v118
    %v286 = vunpack.c.h.b16 %v118
    %v287 = vunpack.c.l.b16 %v119
    %v288 = vunpack.c.h.b16 %v119
    %v289 = vunpack.c.l.b16 %v120
    %v290 = vunpack.c.h.b16 %v120
    %v291 = vunpack.c.l.b16 %v121
    %v292 = vunpack.c.h.b16 %v121
    %v293 = vunpack.c.l.b16 %v122
    %v294 = vunpack.c.h.b16 %v122
    %v295 = vunpack.c.l.b16 %v123
    %v296 = vunpack.c.h.b16 %v123
    %v297 = vunpack.c.l.b16 %v124
    %v298 = vunpack.c.h.b16 %v124
    %v299 = vpack.c.b16 %v225, %v223
    %v300 = vpack.c.b16 %v226, %v224
    %v301 = vpack.c.b16 %v229, %v227
    %v302 = vpack.c.b16 %v230, %v228
    %v303 = vpack.c.b16 %v233, %v231
    %v304 = vpack.c.b16 %v234, %v232
    %v305 = vpack.c.b16 %v237, %v235
    %v306 = vpack.c.b16 %v238, %v236
    %v307 = vpack.c.b16 %v241, %v239
    %v308 = vpack.c.b16 %v242, %v240
    %v309 = vpack.c.b16 %v245, %v243
    %v310 = vpack.c.b16 %v246, %v244
    %v311 = vpack.c.b16 %v249, %v247
    %v312 = vpack.c.b16 %v250, %v248
    %v313 = vpack.c.b16 %v253, %v251
    %v314 = vpack.c.b16 %v254, %v252
    %v315 = vpack.c.b16 %v257, %v255
    %v316 = vpack.c.b16 %v258, %v256
    %v317 = vpack.c.b16 %v261, %v259
    %v318 = vpack.c.b16 %v262, %v260
    %v319 = vpack.c.b16 %v265, %v263
    %v320 = vpack.c.b16 %v266, %v264
    %v321 = vpack.c.b16 %v269, %v267
    %v322 = vpack.c.b16 %v270, %v268
    %v323 = vpack.c.b16 %v273, %v271
    %v324 = vpack.c.b16 %v274, %v272
    %v325 = vpack.c.b16 %v277, %v275
    %v326 = vpack.c.b16 %v278, %v276
    %v327 = vpack.c.b16 %v281, %v279
    %v328 = vpack.c.b16 %v282, %v280
    %v329 = vpack.c.b16 %v285, %v283
    %v330 = vpack.c.b16 %v286, %v284
    %v331 = vpack.c.b16 %v289, %v287
    %v332 = vpack.c.b16 %v290, %v288
    %v333 = vpack.c.b16 %v293, %v291
    %v334 = vpack.c.b16 %v294, %v292
    %v335 = vpack.c.b16 %v297, %v295
    %v336 = vpack.c.b16 %v298, %v296
    %vm373 = vcmask 359424
    %v375 = vsel %vm373, %v167, 0
    %v378 = vsel %vm373, %v170, 0
    %v381 = vsel %vm373, %v173, 0
    %v384 = vsel %vm373, %v176, 0
    %vm386 = vcmask 1045504
    %v388 = vsel %vm386, %v335, 0
    %v391 = vsel %vm386, %v336, 0
    %393 = vmatpush.bf16.msra.mxu0 %v313
    %394 = vmatpush.bf16.msra.mxu0 %v311
    %395 = vmatpush.bf16.msra.mxu0 %v309
    %396 = vmatpush.bf16.msra.mxu0 %v307
    %397 = vmatpush.bf16.msra.mxu0 %v305
    %398 = vmatpush.bf16.msra.mxu0 %v303
    %399 = vmatpush.bf16.msra.mxu0 %v301
    %400 = vmatpush.bf16.msra.mxu0 %v299
    %401 = vmatmul.bf16.gmra.mxu0 %v165
    %v402 = vpop.f32.mrf.mxu0
    %v403 = vadd.f32 0.0, %v402
    %v404 = vpop.f32.mrf.mxu0
    %v405 = vadd.f32 0.0, %v404
    %406 = vmatmul.bf16.gmra.mxu0 %v168
    %v407 = vpop.f32.mrf.mxu0
    %v408 = vadd.f32 0.0, %v407
    %v409 = vpop.f32.mrf.mxu0
    %v410 = vadd.f32 0.0, %v409
    %411 = vmatmul.bf16.gmra.mxu0 %v171
    %v412 = vpop.f32.mrf.mxu0
    %v413 = vadd.f32 0.0, %v412
    %v414 = vpop.f32.mrf.mxu0
    %v415 = vadd.f32 0.0, %v414
    %416 = vmatmul.bf16.gmra.mxu0 %v174
    %v417 = vpop.f32.mrf.mxu0
    %v418 = vadd.f32 0.0, %v417
    %v419 = vpop.f32.mrf.mxu0
    %v420 = vadd.f32 0.0, %v419
    %421 = vdwg.mxu0
    %422 = vmatpush.bf16.msra.mxu0 %v329
    %423 = vmatpush.bf16.msra.mxu0 %v327
    %424 = vmatpush.bf16.msra.mxu0 %v325
    %425 = vmatpush.bf16.msra.mxu0 %v323
    %426 = vmatpush.bf16.msra.mxu0 %v321
    %427 = vmatpush.bf16.msra.mxu0 %v319
    %428 = vmatpush.bf16.msra.mxu0 %v317
    %429 = vmatpush.bf16.msra.mxu0 %v315
    %430 = vmatmul.bf16.gmra.mxu0 %v166
    %v431 = vpop.f32.mrf.mxu0
    %v432 = vadd.f32 %v403, %v431
    %v433 = vpop.f32.mrf.mxu0
    %v434 = vadd.f32 %v405, %v433
    %435 = vmatmul.bf16.gmra.mxu0 %v169
    %v436 = vpop.f32.mrf.mxu0
    %v437 = vadd.f32 %v408, %v436
    %v438 = vpop.f32.mrf.mxu0
    %v439 = vadd.f32 %v410, %v438
    %440 = vmatmul.bf16.gmra.mxu0 %v172
    %v441 = vpop.f32.mrf.mxu0
    %v442 = vadd.f32 %v413, %v441
    %v443 = vpop.f32.mrf.mxu0
    %v444 = vadd.f32 %v415, %v443
    %445 = vmatmul.bf16.gmra.mxu0 %v175
    %v446 = vpop.f32.mrf.mxu0
    %v447 = vadd.f32 %v418, %v446
    %v448 = vpop.f32.mrf.mxu0
    %v449 = vadd.f32 %v420, %v448
    %450 = vdwg.mxu0
    %451 = vmatpush.bf16.msra.mxu0 0
    %452 = vmatpush.bf16.msra.mxu0 0
    %453 = vmatpush.bf16.msra.mxu0 0
    %454 = vmatpush.bf16.msra.mxu0 0
    %455 = vmatpush.bf16.msra.mxu0 0
    %456 = vmatpush.bf16.msra.mxu0 %v388
    %457 = vmatpush.bf16.msra.mxu0 %v333
    %458 = vmatpush.bf16.msra.mxu0 %v331
    %459 = vmatmul.bf16.gmra.mxu0 %v375
    %v460 = vpop.f32.mrf.mxu0
    %v461 = vadd.f32 %v432, %v460
    %v462 = vpop.f32.mrf.mxu0
    %v463 = vadd.f32 %v434, %v462
    %464 = vmatmul.bf16.gmra.mxu0 %v378
    %v465 = vpop.f32.mrf.mxu0
    %v466 = vadd.f32 %v437, %v465
    %v467 = vpop.f32.mrf.mxu0
    %v468 = vadd.f32 %v439, %v467
    %469 = vmatmul.bf16.gmra.mxu0 %v381
    %v470 = vpop.f32.mrf.mxu0
    %v471 = vadd.f32 %v442, %v470
    %v472 = vpop.f32.mrf.mxu0
    %v473 = vadd.f32 %v444, %v472
    %474 = vmatmul.bf16.gmra.mxu0 %v384
    %v475 = vpop.f32.mrf.mxu0
    %v476 = vadd.f32 %v447, %v475
    %v477 = vpop.f32.mrf.mxu0
    %v478 = vadd.f32 %v449, %v477
    %479 = vdwg.mxu0
    %480 = vmatpush.bf16.msra.mxu0 %v314
    %481 = vmatpush.bf16.msra.mxu0 %v312
    %482 = vmatpush.bf16.msra.mxu0 %v310
    %483 = vmatpush.bf16.msra.mxu0 %v308
    %484 = vmatpush.bf16.msra.mxu0 %v306
    %485 = vmatpush.bf16.msra.mxu0 %v304
    %486 = vmatpush.bf16.msra.mxu0 %v302
    %487 = vmatpush.bf16.msra.mxu0 %v300
    %488 = vmatmul.bf16.gmra.mxu0 %v165
    %v489 = vpop.f32.mrf.mxu0
    %v490 = vadd.f32 0.0, %v489
    %v491 = vpop.f32.mrf.mxu0
    %v492 = vadd.f32 0.0, %v491
    %493 = vmatmul.bf16.gmra.mxu0 %v168
    %v494 = vpop.f32.mrf.mxu0
    %v495 = vadd.f32 0.0, %v494
    %v496 = vpop.f32.mrf.mxu0
    %v497 = vadd.f32 0.0, %v496
    %498 = vmatmul.bf16.gmra.mxu0 %v171
    %v499 = vpop.f32.mrf.mxu0
    %v500 = vadd.f32 0.0, %v499
    %v501 = vpop.f32.mrf.mxu0
    %v502 = vadd.f32 0.0, %v501
    %503 = vmatmul.bf16.gmra.mxu0 %v174
    %v504 = vpop.f32.mrf.mxu0
    %v505 = vadd.f32 0.0, %v504
    %v506 = vpop.f32.mrf.mxu0
    %v507 = vadd.f32 0.0, %v506
    %508 = vdwg.mxu0
    %509 = vmatpush.bf16.msra.mxu0 %v330
    %510 = vmatpush.bf16.msra.mxu0 %v328
    %511 = vmatpush.bf16.msra.mxu0 %v326
    %512 = vmatpush.bf16.msra.mxu0 %v324
    %513 = vmatpush.bf16.msra.mxu0 %v322
    %514 = vmatpush.bf16.msra.mxu0 %v320
    %515 = vmatpush.bf16.msra.mxu0 %v318
    %516 = vmatpush.bf16.msra.mxu0 %v316
    %517 = vmatmul.bf16.gmra.mxu0 %v166
    %v518 = vpop.f32.mrf.mxu0
    %v519 = vadd.f32 %v490, %v518
    %v520 = vpop.f32.mrf.mxu0
    %v521 = vadd.f32 %v492, %v520
    %522 = vmatmul.bf16.gmra.mxu0 %v169
    %v523 = vpop.f32.mrf.mxu0
    %v524 = vadd.f32 %v495, %v523
    %v525 = vpop.f32.mrf.mxu0
    %v526 = vadd.f32 %v497, %v525
    %527 = vmatmul.bf16.gmra.mxu0 %v172
    %v528 = vpop.f32.mrf.mxu0
    %v529 = vadd.f32 %v500, %v528
    %v530 = vpop.f32.mrf.mxu0
    %v531 = vadd.f32 %v502, %v530
    %532 = vmatmul.bf16.gmra.mxu0 %v175
    %v533 = vpop.f32.mrf.mxu0
    %v534 = vadd.f32 %v505, %v533
    %v535 = vpop.f32.mrf.mxu0
    %v536 = vadd.f32 %v507, %v535
    %537 = vdwg.mxu0
    %538 = vmatpush.bf16.msra.mxu0 0
    %539 = vmatpush.bf16.msra.mxu0 0
    %540 = vmatpush.bf16.msra.mxu0 0
    %541 = vmatpush.bf16.msra.mxu0 0
    %542 = vmatpush.bf16.msra.mxu0 0
    %543 = vmatpush.bf16.msra.mxu0 %v391
    %544 = vmatpush.bf16.msra.mxu0 %v334
    %545 = vmatpush.bf16.msra.mxu0 %v332
    %546 = vmatmul.bf16.gmra.mxu0 %v375
    %v547 = vpop.f32.mrf.mxu0
    %v548 = vadd.f32 %v519, %v547
    %v549 = vpop.f32.mrf.mxu0
    %v550 = vadd.f32 %v521, %v549
    %551 = vmatmul.bf16.gmra.mxu0 %v378
    %v552 = vpop.f32.mrf.mxu0
    %v553 = vadd.f32 %v524, %v552
    %v554 = vpop.f32.mrf.mxu0
    %v555 = vadd.f32 %v526, %v554
    %556 = vmatmul.bf16.gmra.mxu0 %v381
    %v557 = vpop.f32.mrf.mxu0
    %v558 = vadd.f32 %v529, %v557
    %v559 = vpop.f32.mrf.mxu0
    %v560 = vadd.f32 %v531, %v559
    %561 = vmatmul.bf16.gmra.mxu0 %v384
    %v562 = vpop.f32.mrf.mxu0
    %v563 = vadd.f32 %v534, %v562
    %v564 = vpop.f32.mrf.mxu0
    %v565 = vadd.f32 %v536, %v564
    %566 = vdwg.mxu0
    %v567 = vld [vmem:[%s3] sm:$0xff]
    %v568 = vld [vmem:[%s3 + $0x8] sm:$0xff]
    %v569 = vld [vmem:[%s3 + $0x10] sm:$0xff]
    %v570 = vld [vmem:[%s3 + $0x18] sm:$0xff]
    %v571 = vld [vmem:[%s4] sm:$0xff]
    %v572 = vld [vmem:[%s4 + $0x8] sm:$0xff]
    %v573 = vld [vmem:[%s4 + $0x10] sm:$0xff]
    %v574 = vld [vmem:[%s4 + $0x18] sm:$0xff]
    %v575 = vld [vmem:[%s5] sm:$0x1]
    %v576 = vld [vmem:[%s6] sm:$0x1]
    %vm577 = vcmask 261120
    %v579 = vsel %vm577, 0.0, 0
    %581 = vmatpush.msra.mxu0 0.0
    %582 = vmatpush.msra.mxu0 0.0
    %583 = vmatpush.msra.mxu0 0.0
    %584 = vmatpush.msra.mxu0 0.0
    %585 = vmatpush.msra.mxu0 0.0
    %586 = vmatpush.msra.mxu0 0.0
    %587 = vmatpush.msra.mxu0 0.0
    %588 = vmatpush.msra.mxu0 0.0
    %589 = vmatpush.msra.mxu0 0.0
    %590 = vmatpush.msra.mxu0 0.0
    %591 = vmatpush.msra.mxu0 0.0
    %592 = vmatpush.msra.mxu0 0.0
    %593 = vmatpush.msra.mxu0 %v570
    %594 = vmatpush.msra.mxu0 %v569
    %595 = vmatpush.msra.mxu0 %v568
    %596 = vmatpush.msra.mxu0 %v567
    %597 = vmatmul.f32.gmra.mxu0 %v579
    %v598 = vpop.f32.mrf.mxu0
    %v599 = vadd.f32 0.0, %v598
    %600 = vdwg.mxu0
    %v601 = vadd.f32 %v461, %v599
    %v603 = vperm.slane %v575, 0
    %v605 = vadd.f32 %v601, %v603
    %606 = vmatpush.msra.mxu0 0.0
    %607 = vmatpush.msra.mxu0 0.0
    %608 = vmatpush.msra.mxu0 0.0
    %609 = vmatpush.msra.mxu0 0.0
    %610 = vmatpush.msra.mxu0 0.0
    %611 = vmatpush.msra.mxu0 0.0
    %612 = vmatpush.msra.mxu0 0.0
    %613 = vmatpush.msra.mxu0 0.0
    %614 = vmatpush.msra.mxu0 0.0
    %615 = vmatpush.msra.mxu0 0.0
    %616 = vmatpush.msra.mxu0 0.0
    %617 = vmatpush.msra.mxu0 0.0
    %618 = vmatpush.msra.mxu0 %v574
    %619 = vmatpush.msra.mxu0 %v573
    %620 = vmatpush.msra.mxu0 %v572
    %621 = vmatpush.msra.mxu0 %v571
    %622 = vmatmul.f32.gmra.mxu0 %v579
    %v623 = vpop.f32.mrf.mxu0
    %v624 = vadd.f32 0.0, %v623
    %625 = vdwg.mxu0
    %v626 = vadd.f32 %v565, %v624
    %v628 = vperm.slane %v576, 0
    %v630 = vadd.f32 %v626, %v628
    %v631 = vxor.u32 %v605, 2147483648
    %v632 = vmul.f32 %v631, 1.442695
    %v633 = vpow.pop %v632
    %v634 = vadd.f32 %v633, 1.0
    %v635 = vrcp.pop %v634
    %v636 = vmul.f32 %v634, %v635
    %v637 = vsub.f32 1.0, %v636
    %v638 = vmul.f32 %v635, %v637
    %v639 = vadd.f32 %v635, %v638
    %vm640 = vweird.f32 %v634
    %vm641 = vweird.f32 %v635
    %vm642 = vmor %vm640, %vm641
    %v643 = vsel %vm642, %v635, %v639
    %v644 = vand.u32 2147483647, %v634
    %vm645 = vcmp.eq.f32.partialorder %v644, 8.507059e+37
    %v646 = vand.u32 %v634, 2147483648
    %v647 = vor.u32 1.1754944e-38, %v646
    %v648 = vsel %vm645, %v647, %v643
    %v649 = vmul.f32 1.0, %v648
    %v650 = vtanh.pop %v605
    %v651 = vmul.f32 %v649, 0.0
    %653 = vrot.lane.b32.xlu0 %v650, 64
    %v654 = vpop.permute.xlu0 %653
    %v656 = vmul.f32 %v649, %v654
    %658 = vrot.lane.b32.xlu0 %v656, 32
    %v659 = vpop.permute.xlu0 %658
    %v661 = vadd.f32 %v651, %v659
    %v662 = vtanh.pop %v661
    %664 = vrot.lane.b32.xlu0 %v662, 64
    %v665 = vpop.permute.xlu0 %664
    %v667 = vmul.f32 %v649, %v665
    %v668 = vxor.u32 %v630, 2147483648
    %v669 = vmul.f32 %v668, 1.442695
    %v670 = vpow.pop %v669
    %v671 = vadd.f32 %v670, 1.0
    %v672 = vrcp.pop %v671
    %v673 = vmul.f32 %v671, %v672
    %v674 = vsub.f32 1.0, %v673
    %v675 = vmul.f32 %v672, %v674
    %v676 = vadd.f32 %v672, %v675
    %vm677 = vweird.f32 %v671
    %vm678 = vweird.f32 %v672
    %vm679 = vmor %vm677, %vm678
    %v680 = vsel %vm679, %v672, %v676
    %v681 = vand.u32 2147483647, %v671
    %vm682 = vcmp.eq.f32.partialorder %v681, 8.507059e+37
    %v683 = vand.u32 %v671, 2147483648
    %v684 = vor.u32 1.1754944e-38, %v683
    %v685 = vsel %vm682, %v684, %v680
    %v686 = vmul.f32 1.0, %v685
    %v687 = vtanh.pop %v630
    %v688 = vmul.f32 %v686, 0.0
    %690 = vrot.lane.b32.xlu0 %v687, 64
    %v691 = vpop.permute.xlu0 %690
    %v693 = vmul.f32 %v686, %v691
    %695 = vrot.lane.b32.xlu0 %v693, 32
    %v696 = vpop.permute.xlu0 %695
    %v698 = vadd.f32 %v688, %v696
    %v699 = vtanh.pop %v698
    %701 = vrot.lane.b32.xlu0 %v699, 64
    %v702 = vpop.permute.xlu0 %701
    %v704 = vmul.f32 %v686, %v702
    %vm705 = vcmp.gt.s32.totalorder %v70, 0
    %vm706 = vcmp.gt.s32.totalorder %v70, 7
    %v707 = vsel %vm705, 1, 0
    %708 = vset.pattern.permute.xlu0 0
    %709 = vperm.xlu0 %708, %v707
    %v710 = vpop.permute.xlu0 %709
    %vm711 = vcmp.eq.s32.totalorder %v710, 1
    %v712 = vsel %vm711, %v667, 0.0
    %v713 = vsel %vm711, %v661, 0.0
    %v714 = vsel %vm706, 1, 0
    %715 = vset.pattern.permute.xlu0 0
    %716 = vperm.xlu0 %715, %v714
    %v717 = vpop.permute.xlu0 %716
    %vm718 = vcmp.eq.s32.totalorder %v717, 1
    %v719 = vsel %vm718, %v704, 0.0
    %v720 = vsel %vm718, %v698, 0.0
    %722 = vrot.lane.b32.xlu0 %v712, 32
    %v723 = vpop.permute.xlu0 %722
    %v724 = vsel %vm577, %v723, 0
    %726 = vmatpush.msra.mxu0 0.0
    %727 = vmatpush.msra.mxu0 0.0
    %728 = vmatpush.msra.mxu0 0.0
    %729 = vmatpush.msra.mxu0 0.0
    %730 = vmatpush.msra.mxu0 0.0
    %731 = vmatpush.msra.mxu0 0.0
    %732 = vmatpush.msra.mxu0 0.0
    %733 = vmatpush.msra.mxu0 0.0
    %734 = vmatpush.msra.mxu0 0.0
    %735 = vmatpush.msra.mxu0 0.0
    %736 = vmatpush.msra.mxu0 0.0
    %737 = vmatpush.msra.mxu0 0.0
    %738 = vmatpush.msra.mxu0 %v570
    %739 = vmatpush.msra.mxu0 %v569
    %740 = vmatpush.msra.mxu0 %v568
    %741 = vmatpush.msra.mxu0 %v567
    %742 = vmatmul.f32.gmra.mxu0 %v724
    %v743 = vpop.f32.mrf.mxu0
    %v744 = vadd.f32 0.0, %v743
    %745 = vdwg.mxu0
    %v746 = vadd.f32 %v463, %v744
    %v747 = vadd.f32 %v746, %v603
    %749 = vrot.lane.b32.xlu0 %v719, 32
    %v750 = vpop.permute.xlu0 %749
    %v751 = vsel %vm577, %v750, 0
    %753 = vmatpush.msra.mxu0 0.0
    %754 = vmatpush.msra.mxu0 0.0
    %755 = vmatpush.msra.mxu0 0.0
    %756 = vmatpush.msra.mxu0 0.0
    %757 = vmatpush.msra.mxu0 0.0
    %758 = vmatpush.msra.mxu0 0.0
    %759 = vmatpush.msra.mxu0 0.0
    %760 = vmatpush.msra.mxu0 0.0
    %761 = vmatpush.msra.mxu0 0.0
    %762 = vmatpush.msra.mxu0 0.0
    %763 = vmatpush.msra.mxu0 0.0
    %764 = vmatpush.msra.mxu0 0.0
    %765 = vmatpush.msra.mxu0 %v574
    %766 = vmatpush.msra.mxu0 %v573
    %767 = vmatpush.msra.mxu0 %v572
    %768 = vmatpush.msra.mxu0 %v571
    %769 = vmatmul.f32.gmra.mxu0 %v751
    %v770 = vpop.f32.mrf.mxu0
    %v771 = vadd.f32 0.0, %v770
    %772 = vdwg.mxu0
    %v773 = vadd.f32 %v563, %v771
    %v774 = vadd.f32 %v773, %v628
    %v775 = vxor.u32 %v747, 2147483648
    %v776 = vmul.f32 %v775, 1.442695
    %v777 = vpow.pop %v776
    %v778 = vadd.f32 %v777, 1.0
    %v779 = vrcp.pop %v778
    %v780 = vmul.f32 %v778, %v779
    %v781 = vsub.f32 1.0, %v780
    %v782 = vmul.f32 %v779, %v781
    %v783 = vadd.f32 %v779, %v782
    %vm784 = vweird.f32 %v778
    %vm785 = vweird.f32 %v779
    %vm786 = vmor %vm784, %vm785
    %v787 = vsel %vm786, %v779, %v783
    %v788 = vand.u32 2147483647, %v778
    %vm789 = vcmp.eq.f32.partialorder %v788, 8.507059e+37
    %v790 = vand.u32 %v778, 2147483648
    %v791 = vor.u32 1.1754944e-38, %v790
    %v792 = vsel %vm789, %v791, %v787
    %v793 = vmul.f32 1.0, %v792
    %v794 = vtanh.pop %v747
    %v795 = vmul.f32 %v793, %v713
    %797 = vrot.lane.b32.xlu0 %v794, 64
    %v798 = vpop.permute.xlu0 %797
    %v800 = vmul.f32 %v793, %v798
    %802 = vrot.lane.b32.xlu0 %v800, 32
    %v803 = vpop.permute.xlu0 %802
    %v805 = vadd.f32 %v795, %v803
    %v806 = vtanh.pop %v805
    %808 = vrot.lane.b32.xlu0 %v806, 64
    %v809 = vpop.permute.xlu0 %808
    %v811 = vmul.f32 %v793, %v809
    %v812 = vxor.u32 %v774, 2147483648
    %v813 = vmul.f32 %v812, 1.442695
    %v814 = vpow.pop %v813
    %v815 = vadd.f32 %v814, 1.0
    %v816 = vrcp.pop %v815
    %v817 = vmul.f32 %v815, %v816
    %v818 = vsub.f32 1.0, %v817
    %v819 = vmul.f32 %v816, %v818
    %v820 = vadd.f32 %v816, %v819
    %vm821 = vweird.f32 %v815
    %vm822 = vweird.f32 %v816
    %vm823 = vmor %vm821, %vm822
    %v824 = vsel %vm823, %v816, %v820
    %v825 = vand.u32 2147483647, %v815
    %vm826 = vcmp.eq.f32.partialorder %v825, 8.507059e+37
    %v827 = vand.u32 %v815, 2147483648
    %v828 = vor.u32 1.1754944e-38, %v827
    %v829 = vsel %vm826, %v828, %v824
    %v830 = vmul.f32 1.0, %v829
    %v831 = vtanh.pop %v774
    %v832 = vmul.f32 %v830, %v720
    %834 = vrot.lane.b32.xlu0 %v831, 64
    %v835 = vpop.permute.xlu0 %834
    %v837 = vmul.f32 %v830, %v835
    %839 = vrot.lane.b32.xlu0 %v837, 32
    %v840 = vpop.permute.xlu0 %839
    %v842 = vadd.f32 %v832, %v840
    %v843 = vtanh.pop %v842
    %845 = vrot.lane.b32.xlu0 %v843, 64
    %v846 = vpop.permute.xlu0 %845
    %v848 = vmul.f32 %v830, %v846
    %vm849 = vcmp.gt.s32.totalorder %v70, 1
    %vm850 = vcmp.gt.s32.totalorder %v70, 6
    %v851 = vsel %vm849, 1, 0
    %852 = vset.pattern.permute.xlu0 0
    %853 = vperm.xlu0 %852, %v851
    %v854 = vpop.permute.xlu0 %853
    %vm855 = vcmp.eq.s32.totalorder %v854, 1
    %v856 = vsel %vm855, %v811, %v712
    %v857 = vsel %vm855, %v805, %v713
    %v858 = vsel %vm850, 1, 0
    %859 = vset.pattern.permute.xlu0 0
    %860 = vperm.xlu0 %859, %v858
    %v861 = vpop.permute.xlu0 %860
    %vm862 = vcmp.eq.s32.totalorder %v861, 1
    %v863 = vsel %vm862, %v848, %v719
    %v864 = vsel %vm862, %v842, %v720
    %866 = vrot.lane.b32.xlu0 %v856, 32
    %v867 = vpop.permute.xlu0 %866
    %v868 = vsel %vm577, %v867, 0
    %870 = vmatpush.msra.mxu0 0.0
    %871 = vmatpush.msra.mxu0 0.0
    %872 = vmatpush.msra.mxu0 0.0
    %873 = vmatpush.msra.mxu0 0.0
    %874 = vmatpush.msra.mxu0 0.0
    %875 = vmatpush.msra.mxu0 0.0
    %876 = vmatpush.msra.mxu0 0.0
    %877 = vmatpush.msra.mxu0 0.0
    %878 = vmatpush.msra.mxu0 0.0
    %879 = vmatpush.msra.mxu0 0.0
    %880 = vmatpush.msra.mxu0 0.0
    %881 = vmatpush.msra.mxu0 0.0
    %882 = vmatpush.msra.mxu0 %v570
    %883 = vmatpush.msra.mxu0 %v569
    %884 = vmatpush.msra.mxu0 %v568
    %885 = vmatpush.msra.mxu0 %v567
    %886 = vmatmul.f32.gmra.mxu0 %v868
    %v887 = vpop.f32.mrf.mxu0
    %v888 = vadd.f32 0.0, %v887
    %889 = vdwg.mxu0
    %v890 = vadd.f32 %v466, %v888
    %v891 = vadd.f32 %v890, %v603
    %893 = vrot.lane.b32.xlu0 %v863, 32
    %v894 = vpop.permute.xlu0 %893
    %v895 = vsel %vm577, %v894, 0
    %897 = vmatpush.msra.mxu0 0.0
    %898 = vmatpush.msra.mxu0 0.0
    %899 = vmatpush.msra.mxu0 0.0
    %900 = vmatpush.msra.mxu0 0.0
    %901 = vmatpush.msra.mxu0 0.0
    %902 = vmatpush.msra.mxu0 0.0
    %903 = vmatpush.msra.mxu0 0.0
    %904 = vmatpush.msra.mxu0 0.0
    %905 = vmatpush.msra.mxu0 0.0
    %906 = vmatpush.msra.mxu0 0.0
    %907 = vmatpush.msra.mxu0 0.0
    %908 = vmatpush.msra.mxu0 0.0
    %909 = vmatpush.msra.mxu0 %v574
    %910 = vmatpush.msra.mxu0 %v573
    %911 = vmatpush.msra.mxu0 %v572
    %912 = vmatpush.msra.mxu0 %v571
    %913 = vmatmul.f32.gmra.mxu0 %v895
    %v914 = vpop.f32.mrf.mxu0
    %v915 = vadd.f32 0.0, %v914
    %916 = vdwg.mxu0
    %v917 = vadd.f32 %v560, %v915
    %v918 = vadd.f32 %v917, %v628
    %v919 = vxor.u32 %v891, 2147483648
    %v920 = vmul.f32 %v919, 1.442695
    %v921 = vpow.pop %v920
    %v922 = vadd.f32 %v921, 1.0
    %v923 = vrcp.pop %v922
    %v924 = vmul.f32 %v922, %v923
    %v925 = vsub.f32 1.0, %v924
    %v926 = vmul.f32 %v923, %v925
    %v927 = vadd.f32 %v923, %v926
    %vm928 = vweird.f32 %v922
    %vm929 = vweird.f32 %v923
    %vm930 = vmor %vm928, %vm929
    %v931 = vsel %vm930, %v923, %v927
    %v932 = vand.u32 2147483647, %v922
    %vm933 = vcmp.eq.f32.partialorder %v932, 8.507059e+37
    %v934 = vand.u32 %v922, 2147483648
    %v935 = vor.u32 1.1754944e-38, %v934
    %v936 = vsel %vm933, %v935, %v931
    %v937 = vmul.f32 1.0, %v936
    %v938 = vtanh.pop %v891
    %v939 = vmul.f32 %v937, %v857
    %941 = vrot.lane.b32.xlu0 %v938, 64
    %v942 = vpop.permute.xlu0 %941
    %v944 = vmul.f32 %v937, %v942
    %946 = vrot.lane.b32.xlu0 %v944, 32
    %v947 = vpop.permute.xlu0 %946
    %v949 = vadd.f32 %v939, %v947
    %v950 = vtanh.pop %v949
    %952 = vrot.lane.b32.xlu0 %v950, 64
    %v953 = vpop.permute.xlu0 %952
    %v955 = vmul.f32 %v937, %v953
    %v956 = vxor.u32 %v918, 2147483648
    %v957 = vmul.f32 %v956, 1.442695
    %v958 = vpow.pop %v957
    %v959 = vadd.f32 %v958, 1.0
    %v960 = vrcp.pop %v959
    %v961 = vmul.f32 %v959, %v960
    %v962 = vsub.f32 1.0, %v961
    %v963 = vmul.f32 %v960, %v962
    %v964 = vadd.f32 %v960, %v963
    %vm965 = vweird.f32 %v959
    %vm966 = vweird.f32 %v960
    %vm967 = vmor %vm965, %vm966
    %v968 = vsel %vm967, %v960, %v964
    %v969 = vand.u32 2147483647, %v959
    %vm970 = vcmp.eq.f32.partialorder %v969, 8.507059e+37
    %v971 = vand.u32 %v959, 2147483648
    %v972 = vor.u32 1.1754944e-38, %v971
    %v973 = vsel %vm970, %v972, %v968
    %v974 = vmul.f32 1.0, %v973
    %v975 = vtanh.pop %v918
    %v976 = vmul.f32 %v974, %v864
    %978 = vrot.lane.b32.xlu0 %v975, 64
    %v979 = vpop.permute.xlu0 %978
    %v981 = vmul.f32 %v974, %v979
    %983 = vrot.lane.b32.xlu0 %v981, 32
    %v984 = vpop.permute.xlu0 %983
    %v986 = vadd.f32 %v976, %v984
    %v987 = vtanh.pop %v986
    %989 = vrot.lane.b32.xlu0 %v987, 64
    %v990 = vpop.permute.xlu0 %989
    %v992 = vmul.f32 %v974, %v990
    %vm993 = vcmp.gt.s32.totalorder %v70, 2
    %vm994 = vcmp.gt.s32.totalorder %v70, 5
    %v995 = vsel %vm993, 1, 0
    %996 = vset.pattern.permute.xlu0 0
    %997 = vperm.xlu0 %996, %v995
    %v998 = vpop.permute.xlu0 %997
    %vm999 = vcmp.eq.s32.totalorder %v998, 1
    %v1000 = vsel %vm999, %v955, %v856
    %v1001 = vsel %vm999, %v949, %v857
    %v1002 = vsel %vm994, 1, 0
    %1003 = vset.pattern.permute.xlu0 0
    %1004 = vperm.xlu0 %1003, %v1002
    %v1005 = vpop.permute.xlu0 %1004
    %vm1006 = vcmp.eq.s32.totalorder %v1005, 1
    %v1007 = vsel %vm1006, %v992, %v863
    %v1008 = vsel %vm1006, %v986, %v864
    %1010 = vrot.lane.b32.xlu0 %v1000, 32
    %v1011 = vpop.permute.xlu0 %1010
    %v1012 = vsel %vm577, %v1011, 0
    %1014 = vmatpush.msra.mxu0 0.0
    %1015 = vmatpush.msra.mxu0 0.0
    %1016 = vmatpush.msra.mxu0 0.0
    %1017 = vmatpush.msra.mxu0 0.0
    %1018 = vmatpush.msra.mxu0 0.0
    %1019 = vmatpush.msra.mxu0 0.0
    %1020 = vmatpush.msra.mxu0 0.0
    %1021 = vmatpush.msra.mxu0 0.0
    %1022 = vmatpush.msra.mxu0 0.0
    %1023 = vmatpush.msra.mxu0 0.0
    %1024 = vmatpush.msra.mxu0 0.0
    %1025 = vmatpush.msra.mxu0 0.0
    %1026 = vmatpush.msra.mxu0 %v570
    %1027 = vmatpush.msra.mxu0 %v569
    %1028 = vmatpush.msra.mxu0 %v568
    %1029 = vmatpush.msra.mxu0 %v567
    %1030 = vmatmul.f32.gmra.mxu0 %v1012
    %v1031 = vpop.f32.mrf.mxu0
    %v1032 = vadd.f32 0.0, %v1031
    %1033 = vdwg.mxu0
    %v1034 = vadd.f32 %v468, %v1032
    %v1035 = vadd.f32 %v1034, %v603
    %1037 = vrot.lane.b32.xlu0 %v1007, 32
    %v1038 = vpop.permute.xlu0 %1037
    %v1039 = vsel %vm577, %v1038, 0
    %1041 = vmatpush.msra.mxu0 0.0
    %1042 = vmatpush.msra.mxu0 0.0
    %1043 = vmatpush.msra.mxu0 0.0
    %1044 = vmatpush.msra.mxu0 0.0
    %1045 = vmatpush.msra.mxu0 0.0
    %1046 = vmatpush.msra.mxu0 0.0
    %1047 = vmatpush.msra.mxu0 0.0
    %1048 = vmatpush.msra.mxu0 0.0
    %1049 = vmatpush.msra.mxu0 0.0
    %1050 = vmatpush.msra.mxu0 0.0
    %1051 = vmatpush.msra.mxu0 0.0
    %1052 = vmatpush.msra.mxu0 0.0
    %1053 = vmatpush.msra.mxu0 %v574
    %1054 = vmatpush.msra.mxu0 %v573
    %1055 = vmatpush.msra.mxu0 %v572
    %1056 = vmatpush.msra.mxu0 %v571
    %1057 = vmatmul.f32.gmra.mxu0 %v1039
    %v1058 = vpop.f32.mrf.mxu0
    %v1059 = vadd.f32 0.0, %v1058
    %1060 = vdwg.mxu0
    %v1061 = vadd.f32 %v558, %v1059
    %v1062 = vadd.f32 %v1061, %v628
    %v1063 = vxor.u32 %v1035, 2147483648
    %v1064 = vmul.f32 %v1063, 1.442695
    %v1065 = vpow.pop %v1064
    %v1066 = vadd.f32 %v1065, 1.0
    %v1067 = vrcp.pop %v1066
    %v1068 = vmul.f32 %v1066, %v1067
    %v1069 = vsub.f32 1.0, %v1068
    %v1070 = vmul.f32 %v1067, %v1069
    %v1071 = vadd.f32 %v1067, %v1070
    %vm1072 = vweird.f32 %v1066
    %vm1073 = vweird.f32 %v1067
    %vm1074 = vmor %vm1072, %vm1073
    %v1075 = vsel %vm1074, %v1067, %v1071
    %v1076 = vand.u32 2147483647, %v1066
    %vm1077 = vcmp.eq.f32.partialorder %v1076, 8.507059e+37
    %v1078 = vand.u32 %v1066, 2147483648
    %v1079 = vor.u32 1.1754944e-38, %v1078
    %v1080 = vsel %vm1077, %v1079, %v1075
    %v1081 = vmul.f32 1.0, %v1080
    %v1082 = vtanh.pop %v1035
    %v1083 = vmul.f32 %v1081, %v1001
    %1085 = vrot.lane.b32.xlu0 %v1082, 64
    %v1086 = vpop.permute.xlu0 %1085
    %v1088 = vmul.f32 %v1081, %v1086
    %1090 = vrot.lane.b32.xlu0 %v1088, 32
    %v1091 = vpop.permute.xlu0 %1090
    %v1093 = vadd.f32 %v1083, %v1091
    %v1094 = vtanh.pop %v1093
    %1096 = vrot.lane.b32.xlu0 %v1094, 64
    %v1097 = vpop.permute.xlu0 %1096
    %v1099 = vmul.f32 %v1081, %v1097
    %v1100 = vxor.u32 %v1062, 2147483648
    %v1101 = vmul.f32 %v1100, 1.442695
    %v1102 = vpow.pop %v1101
    %v1103 = vadd.f32 %v1102, 1.0
    %v1104 = vrcp.pop %v1103
    %v1105 = vmul.f32 %v1103, %v1104
    %v1106 = vsub.f32 1.0, %v1105
    %v1107 = vmul.f32 %v1104, %v1106
    %v1108 = vadd.f32 %v1104, %v1107
    %vm1109 = vweird.f32 %v1103
    %vm1110 = vweird.f32 %v1104
    %vm1111 = vmor %vm1109, %vm1110
    %v1112 = vsel %vm1111, %v1104, %v1108
    %v1113 = vand.u32 2147483647, %v1103
    %vm1114 = vcmp.eq.f32.partialorder %v1113, 8.507059e+37
    %v1115 = vand.u32 %v1103, 2147483648
    %v1116 = vor.u32 1.1754944e-38, %v1115
    %v1117 = vsel %vm1114, %v1116, %v1112
    %v1118 = vmul.f32 1.0, %v1117
    %v1119 = vtanh.pop %v1062
    %v1120 = vmul.f32 %v1118, %v1008
    %1122 = vrot.lane.b32.xlu0 %v1119, 64
    %v1123 = vpop.permute.xlu0 %1122
    %v1125 = vmul.f32 %v1118, %v1123
    %1127 = vrot.lane.b32.xlu0 %v1125, 32
    %v1128 = vpop.permute.xlu0 %1127
    %v1130 = vadd.f32 %v1120, %v1128
    %v1131 = vtanh.pop %v1130
    %1133 = vrot.lane.b32.xlu0 %v1131, 64
    %v1134 = vpop.permute.xlu0 %1133
    %v1136 = vmul.f32 %v1118, %v1134
    %vm1137 = vcmp.gt.s32.totalorder %v70, 3
    %vm1138 = vcmp.gt.s32.totalorder %v70, 4
    %v1139 = vsel %vm1137, 1, 0
    %1140 = vset.pattern.permute.xlu0 0
    %1141 = vperm.xlu0 %1140, %v1139
    %v1142 = vpop.permute.xlu0 %1141
    %vm1143 = vcmp.eq.s32.totalorder %v1142, 1
    %v1144 = vsel %vm1143, %v1099, %v1000
    %v1145 = vsel %vm1143, %v1093, %v1001
    %v1146 = vsel %vm1138, 1, 0
    %1147 = vset.pattern.permute.xlu0 0
    %1148 = vperm.xlu0 %1147, %v1146
    %v1149 = vpop.permute.xlu0 %1148
    %vm1150 = vcmp.eq.s32.totalorder %v1149, 1
    %v1151 = vsel %vm1150, %v1136, %v1007
    %v1152 = vsel %vm1150, %v1130, %v1008
    %1154 = vrot.lane.b32.xlu0 %v1144, 32
    %v1155 = vpop.permute.xlu0 %1154
    %v1156 = vsel %vm577, %v1155, 0
    %1158 = vmatpush.msra.mxu0 0.0
    %1159 = vmatpush.msra.mxu0 0.0
    %1160 = vmatpush.msra.mxu0 0.0
    %1161 = vmatpush.msra.mxu0 0.0
    %1162 = vmatpush.msra.mxu0 0.0
    %1163 = vmatpush.msra.mxu0 0.0
    %1164 = vmatpush.msra.mxu0 0.0
    %1165 = vmatpush.msra.mxu0 0.0
    %1166 = vmatpush.msra.mxu0 0.0
    %1167 = vmatpush.msra.mxu0 0.0
    %1168 = vmatpush.msra.mxu0 0.0
    %1169 = vmatpush.msra.mxu0 0.0
    %1170 = vmatpush.msra.mxu0 %v570
    %1171 = vmatpush.msra.mxu0 %v569
    %1172 = vmatpush.msra.mxu0 %v568
    %1173 = vmatpush.msra.mxu0 %v567
    %1174 = vmatmul.f32.gmra.mxu0 %v1156
    %v1175 = vpop.f32.mrf.mxu0
    %v1176 = vadd.f32 0.0, %v1175
    %1177 = vdwg.mxu0
    %v1178 = vadd.f32 %v471, %v1176
    %v1179 = vadd.f32 %v1178, %v603
    %1181 = vrot.lane.b32.xlu0 %v1151, 32
    %v1182 = vpop.permute.xlu0 %1181
    %v1183 = vsel %vm577, %v1182, 0
    %1185 = vmatpush.msra.mxu0 0.0
    %1186 = vmatpush.msra.mxu0 0.0
    %1187 = vmatpush.msra.mxu0 0.0
    %1188 = vmatpush.msra.mxu0 0.0
    %1189 = vmatpush.msra.mxu0 0.0
    %1190 = vmatpush.msra.mxu0 0.0
    %1191 = vmatpush.msra.mxu0 0.0
    %1192 = vmatpush.msra.mxu0 0.0
    %1193 = vmatpush.msra.mxu0 0.0
    %1194 = vmatpush.msra.mxu0 0.0
    %1195 = vmatpush.msra.mxu0 0.0
    %1196 = vmatpush.msra.mxu0 0.0
    %1197 = vmatpush.msra.mxu0 %v574
    %1198 = vmatpush.msra.mxu0 %v573
    %1199 = vmatpush.msra.mxu0 %v572
    %1200 = vmatpush.msra.mxu0 %v571
    %1201 = vmatmul.f32.gmra.mxu0 %v1183
    %v1202 = vpop.f32.mrf.mxu0
    %v1203 = vadd.f32 0.0, %v1202
    %1204 = vdwg.mxu0
    %v1205 = vadd.f32 %v555, %v1203
    %v1206 = vadd.f32 %v1205, %v628
    %v1207 = vxor.u32 %v1179, 2147483648
    %v1208 = vmul.f32 %v1207, 1.442695
    %v1209 = vpow.pop %v1208
    %v1210 = vadd.f32 %v1209, 1.0
    %v1211 = vrcp.pop %v1210
    %v1212 = vmul.f32 %v1210, %v1211
    %v1213 = vsub.f32 1.0, %v1212
    %v1214 = vmul.f32 %v1211, %v1213
    %v1215 = vadd.f32 %v1211, %v1214
    %vm1216 = vweird.f32 %v1210
    %vm1217 = vweird.f32 %v1211
    %vm1218 = vmor %vm1216, %vm1217
    %v1219 = vsel %vm1218, %v1211, %v1215
    %v1220 = vand.u32 2147483647, %v1210
    %vm1221 = vcmp.eq.f32.partialorder %v1220, 8.507059e+37
    %v1222 = vand.u32 %v1210, 2147483648
    %v1223 = vor.u32 1.1754944e-38, %v1222
    %v1224 = vsel %vm1221, %v1223, %v1219
    %v1225 = vmul.f32 1.0, %v1224
    %v1226 = vtanh.pop %v1179
    %v1227 = vmul.f32 %v1225, %v1145
    %1229 = vrot.lane.b32.xlu0 %v1226, 64
    %v1230 = vpop.permute.xlu0 %1229
    %v1232 = vmul.f32 %v1225, %v1230
    %1234 = vrot.lane.b32.xlu0 %v1232, 32
    %v1235 = vpop.permute.xlu0 %1234
    %v1237 = vadd.f32 %v1227, %v1235
    %v1238 = vtanh.pop %v1237
    %1240 = vrot.lane.b32.xlu0 %v1238, 64
    %v1241 = vpop.permute.xlu0 %1240
    %v1243 = vmul.f32 %v1225, %v1241
    %v1244 = vxor.u32 %v1206, 2147483648
    %v1245 = vmul.f32 %v1244, 1.442695
    %v1246 = vpow.pop %v1245
    %v1247 = vadd.f32 %v1246, 1.0
    %v1248 = vrcp.pop %v1247
    %v1249 = vmul.f32 %v1247, %v1248
    %v1250 = vsub.f32 1.0, %v1249
    %v1251 = vmul.f32 %v1248, %v1250
    %v1252 = vadd.f32 %v1248, %v1251
    %vm1253 = vweird.f32 %v1247
    %vm1254 = vweird.f32 %v1248
    %vm1255 = vmor %vm1253, %vm1254
    %v1256 = vsel %vm1255, %v1248, %v1252
    %v1257 = vand.u32 2147483647, %v1247
    %vm1258 = vcmp.eq.f32.partialorder %v1257, 8.507059e+37
    %v1259 = vand.u32 %v1247, 2147483648
    %v1260 = vor.u32 1.1754944e-38, %v1259
    %v1261 = vsel %vm1258, %v1260, %v1256
    %v1262 = vmul.f32 1.0, %v1261
    %v1263 = vtanh.pop %v1206
    %v1264 = vmul.f32 %v1262, %v1152
    %1266 = vrot.lane.b32.xlu0 %v1263, 64
    %v1267 = vpop.permute.xlu0 %1266
    %v1269 = vmul.f32 %v1262, %v1267
    %1271 = vrot.lane.b32.xlu0 %v1269, 32
    %v1272 = vpop.permute.xlu0 %1271
    %v1274 = vadd.f32 %v1264, %v1272
    %v1275 = vtanh.pop %v1274
    %1277 = vrot.lane.b32.xlu0 %v1275, 64
    %v1278 = vpop.permute.xlu0 %1277
    %v1280 = vmul.f32 %v1262, %v1278
    %v1281 = vsel %vm1150, %v1243, %v1144
    %v1282 = vsel %vm1150, %v1237, %v1145
    %v1283 = vsel %vm1143, %v1280, %v1151
    %v1284 = vsel %vm1143, %v1274, %v1152
    %1286 = vrot.lane.b32.xlu0 %v1281, 32
    %v1287 = vpop.permute.xlu0 %1286
    %v1288 = vsel %vm577, %v1287, 0
    %1290 = vmatpush.msra.mxu0 0.0
    %1291 = vmatpush.msra.mxu0 0.0
    %1292 = vmatpush.msra.mxu0 0.0
    %1293 = vmatpush.msra.mxu0 0.0
    %1294 = vmatpush.msra.mxu0 0.0
    %1295 = vmatpush.msra.mxu0 0.0
    %1296 = vmatpush.msra.mxu0 0.0
    %1297 = vmatpush.msra.mxu0 0.0
    %1298 = vmatpush.msra.mxu0 0.0
    %1299 = vmatpush.msra.mxu0 0.0
    %1300 = vmatpush.msra.mxu0 0.0
    %1301 = vmatpush.msra.mxu0 0.0
    %1302 = vmatpush.msra.mxu0 %v570
    %1303 = vmatpush.msra.mxu0 %v569
    %1304 = vmatpush.msra.mxu0 %v568
    %1305 = vmatpush.msra.mxu0 %v567
    %1306 = vmatmul.f32.gmra.mxu0 %v1288
    %v1307 = vpop.f32.mrf.mxu0
    %v1308 = vadd.f32 0.0, %v1307
    %1309 = vdwg.mxu0
    %v1310 = vadd.f32 %v473, %v1308
    %v1311 = vadd.f32 %v1310, %v603
    %1313 = vrot.lane.b32.xlu0 %v1283, 32
    %v1314 = vpop.permute.xlu0 %1313
    %v1315 = vsel %vm577, %v1314, 0
    %1317 = vmatpush.msra.mxu0 0.0
    %1318 = vmatpush.msra.mxu0 0.0
    %1319 = vmatpush.msra.mxu0 0.0
    %1320 = vmatpush.msra.mxu0 0.0
    %1321 = vmatpush.msra.mxu0 0.0
    %1322 = vmatpush.msra.mxu0 0.0
    %1323 = vmatpush.msra.mxu0 0.0
    %1324 = vmatpush.msra.mxu0 0.0
    %1325 = vmatpush.msra.mxu0 0.0
    %1326 = vmatpush.msra.mxu0 0.0
    %1327 = vmatpush.msra.mxu0 0.0
    %1328 = vmatpush.msra.mxu0 0.0
    %1329 = vmatpush.msra.mxu0 %v574
    %1330 = vmatpush.msra.mxu0 %v573
    %1331 = vmatpush.msra.mxu0 %v572
    %1332 = vmatpush.msra.mxu0 %v571
    %1333 = vmatmul.f32.gmra.mxu0 %v1315
    %v1334 = vpop.f32.mrf.mxu0
    %v1335 = vadd.f32 0.0, %v1334
    %1336 = vdwg.mxu0
    %v1337 = vadd.f32 %v553, %v1335
    %v1338 = vadd.f32 %v1337, %v628
    %v1339 = vxor.u32 %v1311, 2147483648
    %v1340 = vmul.f32 %v1339, 1.442695
    %v1341 = vpow.pop %v1340
    %v1342 = vadd.f32 %v1341, 1.0
    %v1343 = vrcp.pop %v1342
    %v1344 = vmul.f32 %v1342, %v1343
    %v1345 = vsub.f32 1.0, %v1344
    %v1346 = vmul.f32 %v1343, %v1345
    %v1347 = vadd.f32 %v1343, %v1346
    %vm1348 = vweird.f32 %v1342
    %vm1349 = vweird.f32 %v1343
    %vm1350 = vmor %vm1348, %vm1349
    %v1351 = vsel %vm1350, %v1343, %v1347
    %v1352 = vand.u32 2147483647, %v1342
    %vm1353 = vcmp.eq.f32.partialorder %v1352, 8.507059e+37
    %v1354 = vand.u32 %v1342, 2147483648
    %v1355 = vor.u32 1.1754944e-38, %v1354
    %v1356 = vsel %vm1353, %v1355, %v1351
    %v1357 = vmul.f32 1.0, %v1356
    %v1358 = vtanh.pop %v1311
    %v1359 = vmul.f32 %v1357, %v1282
    %1361 = vrot.lane.b32.xlu0 %v1358, 64
    %v1362 = vpop.permute.xlu0 %1361
    %v1364 = vmul.f32 %v1357, %v1362
    %1366 = vrot.lane.b32.xlu0 %v1364, 32
    %v1367 = vpop.permute.xlu0 %1366
    %v1369 = vadd.f32 %v1359, %v1367
    %v1370 = vtanh.pop %v1369
    %1372 = vrot.lane.b32.xlu0 %v1370, 64
    %v1373 = vpop.permute.xlu0 %1372
    %v1375 = vmul.f32 %v1357, %v1373
    %v1376 = vxor.u32 %v1338, 2147483648
    %v1377 = vmul.f32 %v1376, 1.442695
    %v1378 = vpow.pop %v1377
    %v1379 = vadd.f32 %v1378, 1.0
    %v1380 = vrcp.pop %v1379
    %v1381 = vmul.f32 %v1379, %v1380
    %v1382 = vsub.f32 1.0, %v1381
    %v1383 = vmul.f32 %v1380, %v1382
    %v1384 = vadd.f32 %v1380, %v1383
    %vm1385 = vweird.f32 %v1379
    %vm1386 = vweird.f32 %v1380
    %vm1387 = vmor %vm1385, %vm1386
    %v1388 = vsel %vm1387, %v1380, %v1384
    %v1389 = vand.u32 2147483647, %v1379
    %vm1390 = vcmp.eq.f32.partialorder %v1389, 8.507059e+37
    %v1391 = vand.u32 %v1379, 2147483648
    %v1392 = vor.u32 1.1754944e-38, %v1391
    %v1393 = vsel %vm1390, %v1392, %v1388
    %v1394 = vmul.f32 1.0, %v1393
    %v1395 = vtanh.pop %v1338
    %v1396 = vmul.f32 %v1394, %v1284
    %1398 = vrot.lane.b32.xlu0 %v1395, 64
    %v1399 = vpop.permute.xlu0 %1398
    %v1401 = vmul.f32 %v1394, %v1399
    %1403 = vrot.lane.b32.xlu0 %v1401, 32
    %v1404 = vpop.permute.xlu0 %1403
    %v1406 = vadd.f32 %v1396, %v1404
    %v1407 = vtanh.pop %v1406
    %1409 = vrot.lane.b32.xlu0 %v1407, 64
    %v1410 = vpop.permute.xlu0 %1409
    %v1412 = vmul.f32 %v1394, %v1410
    %v1413 = vsel %vm1006, %v1375, %v1281
    %v1414 = vsel %vm1006, %v1369, %v1282
    %v1415 = vsel %vm999, %v1412, %v1283
    %v1416 = vsel %vm999, %v1406, %v1284
    %1418 = vrot.lane.b32.xlu0 %v1413, 32
    %v1419 = vpop.permute.xlu0 %1418
    %v1420 = vsel %vm577, %v1419, 0
    %1422 = vmatpush.msra.mxu0 0.0
    %1423 = vmatpush.msra.mxu0 0.0
    %1424 = vmatpush.msra.mxu0 0.0
    %1425 = vmatpush.msra.mxu0 0.0
    %1426 = vmatpush.msra.mxu0 0.0
    %1427 = vmatpush.msra.mxu0 0.0
    %1428 = vmatpush.msra.mxu0 0.0
    %1429 = vmatpush.msra.mxu0 0.0
    %1430 = vmatpush.msra.mxu0 0.0
    %1431 = vmatpush.msra.mxu0 0.0
    %1432 = vmatpush.msra.mxu0 0.0
    %1433 = vmatpush.msra.mxu0 0.0
    %1434 = vmatpush.msra.mxu0 %v570
    %1435 = vmatpush.msra.mxu0 %v569
    %1436 = vmatpush.msra.mxu0 %v568
    %1437 = vmatpush.msra.mxu0 %v567
    %1438 = vmatmul.f32.gmra.mxu0 %v1420
    %v1439 = vpop.f32.mrf.mxu0
    %v1440 = vadd.f32 0.0, %v1439
    %1441 = vdwg.mxu0
    %v1442 = vadd.f32 %v476, %v1440
    %v1443 = vadd.f32 %v1442, %v603
    %1445 = vrot.lane.b32.xlu0 %v1415, 32
    %v1446 = vpop.permute.xlu0 %1445
    %v1447 = vsel %vm577, %v1446, 0
    %1449 = vmatpush.msra.mxu0 0.0
    %1450 = vmatpush.msra.mxu0 0.0
    %1451 = vmatpush.msra.mxu0 0.0
    %1452 = vmatpush.msra.mxu0 0.0
    %1453 = vmatpush.msra.mxu0 0.0
    %1454 = vmatpush.msra.mxu0 0.0
    %1455 = vmatpush.msra.mxu0 0.0
    %1456 = vmatpush.msra.mxu0 0.0
    %1457 = vmatpush.msra.mxu0 0.0
    %1458 = vmatpush.msra.mxu0 0.0
    %1459 = vmatpush.msra.mxu0 0.0
    %1460 = vmatpush.msra.mxu0 0.0
    %1461 = vmatpush.msra.mxu0 %v574
    %1462 = vmatpush.msra.mxu0 %v573
    %1463 = vmatpush.msra.mxu0 %v572
    %1464 = vmatpush.msra.mxu0 %v571
    %1465 = vmatmul.f32.gmra.mxu0 %v1447
    %v1466 = vpop.f32.mrf.mxu0
    %v1467 = vadd.f32 0.0, %v1466
    %1468 = vdwg.mxu0
    %v1469 = vadd.f32 %v550, %v1467
    %v1470 = vadd.f32 %v1469, %v628
    %v1471 = vxor.u32 %v1443, 2147483648
    %v1472 = vmul.f32 %v1471, 1.442695
    %v1473 = vpow.pop %v1472
    %v1474 = vadd.f32 %v1473, 1.0
    %v1475 = vrcp.pop %v1474
    %v1476 = vmul.f32 %v1474, %v1475
    %v1477 = vsub.f32 1.0, %v1476
    %v1478 = vmul.f32 %v1475, %v1477
    %v1479 = vadd.f32 %v1475, %v1478
    %vm1480 = vweird.f32 %v1474
    %vm1481 = vweird.f32 %v1475
    %vm1482 = vmor %vm1480, %vm1481
    %v1483 = vsel %vm1482, %v1475, %v1479
    %v1484 = vand.u32 2147483647, %v1474
    %vm1485 = vcmp.eq.f32.partialorder %v1484, 8.507059e+37
    %v1486 = vand.u32 %v1474, 2147483648
    %v1487 = vor.u32 1.1754944e-38, %v1486
    %v1488 = vsel %vm1485, %v1487, %v1483
    %v1489 = vmul.f32 1.0, %v1488
    %v1490 = vtanh.pop %v1443
    %v1491 = vmul.f32 %v1489, %v1414
    %1493 = vrot.lane.b32.xlu0 %v1490, 64
    %v1494 = vpop.permute.xlu0 %1493
    %v1496 = vmul.f32 %v1489, %v1494
    %1498 = vrot.lane.b32.xlu0 %v1496, 32
    %v1499 = vpop.permute.xlu0 %1498
    %v1501 = vadd.f32 %v1491, %v1499
    %v1502 = vtanh.pop %v1501
    %1504 = vrot.lane.b32.xlu0 %v1502, 64
    %v1505 = vpop.permute.xlu0 %1504
    %v1507 = vmul.f32 %v1489, %v1505
    %v1508 = vxor.u32 %v1470, 2147483648
    %v1509 = vmul.f32 %v1508, 1.442695
    %v1510 = vpow.pop %v1509
    %v1511 = vadd.f32 %v1510, 1.0
    %v1512 = vrcp.pop %v1511
    %v1513 = vmul.f32 %v1511, %v1512
    %v1514 = vsub.f32 1.0, %v1513
    %v1515 = vmul.f32 %v1512, %v1514
    %v1516 = vadd.f32 %v1512, %v1515
    %vm1517 = vweird.f32 %v1511
    %vm1518 = vweird.f32 %v1512
    %vm1519 = vmor %vm1517, %vm1518
    %v1520 = vsel %vm1519, %v1512, %v1516
    %v1521 = vand.u32 2147483647, %v1511
    %vm1522 = vcmp.eq.f32.partialorder %v1521, 8.507059e+37
    %v1523 = vand.u32 %v1511, 2147483648
    %v1524 = vor.u32 1.1754944e-38, %v1523
    %v1525 = vsel %vm1522, %v1524, %v1520
    %v1526 = vmul.f32 1.0, %v1525
    %v1527 = vtanh.pop %v1470
    %v1528 = vmul.f32 %v1526, %v1416
    %1530 = vrot.lane.b32.xlu0 %v1527, 64
    %v1531 = vpop.permute.xlu0 %1530
    %v1533 = vmul.f32 %v1526, %v1531
    %1535 = vrot.lane.b32.xlu0 %v1533, 32
    %v1536 = vpop.permute.xlu0 %1535
    %v1538 = vadd.f32 %v1528, %v1536
    %v1539 = vtanh.pop %v1538
    %1541 = vrot.lane.b32.xlu0 %v1539, 64
    %v1542 = vpop.permute.xlu0 %1541
    %v1544 = vmul.f32 %v1526, %v1542
    %v1545 = vsel %vm862, %v1507, %v1413
    %v1546 = vsel %vm862, %v1501, %v1414
    %v1547 = vsel %vm855, %v1544, %v1415
    %v1548 = vsel %vm855, %v1538, %v1416
    %1550 = vrot.lane.b32.xlu0 %v1545, 32
    %v1551 = vpop.permute.xlu0 %1550
    %v1552 = vsel %vm577, %v1551, 0
    %1554 = vmatpush.msra.mxu0 0.0
    %1555 = vmatpush.msra.mxu0 0.0
    %1556 = vmatpush.msra.mxu0 0.0
    %1557 = vmatpush.msra.mxu0 0.0
    %1558 = vmatpush.msra.mxu0 0.0
    %1559 = vmatpush.msra.mxu0 0.0
    %1560 = vmatpush.msra.mxu0 0.0
    %1561 = vmatpush.msra.mxu0 0.0
    %1562 = vmatpush.msra.mxu0 0.0
    %1563 = vmatpush.msra.mxu0 0.0
    %1564 = vmatpush.msra.mxu0 0.0
    %1565 = vmatpush.msra.mxu0 0.0
    %1566 = vmatpush.msra.mxu0 %v570
    %1567 = vmatpush.msra.mxu0 %v569
    %1568 = vmatpush.msra.mxu0 %v568
    %1569 = vmatpush.msra.mxu0 %v567
    %1570 = vmatmul.f32.gmra.mxu0 %v1552
    %v1571 = vpop.f32.mrf.mxu0
    %v1572 = vadd.f32 0.0, %v1571
    %1573 = vdwg.mxu0
    %v1574 = vadd.f32 %v478, %v1572
    %v1575 = vadd.f32 %v1574, %v603
    %1577 = vrot.lane.b32.xlu0 %v1547, 32
    %v1578 = vpop.permute.xlu0 %1577
    %v1579 = vsel %vm577, %v1578, 0
    %1581 = vmatpush.msra.mxu0 0.0
    %1582 = vmatpush.msra.mxu0 0.0
    %1583 = vmatpush.msra.mxu0 0.0
    %1584 = vmatpush.msra.mxu0 0.0
    %1585 = vmatpush.msra.mxu0 0.0
    %1586 = vmatpush.msra.mxu0 0.0
    %1587 = vmatpush.msra.mxu0 0.0
    %1588 = vmatpush.msra.mxu0 0.0
    %1589 = vmatpush.msra.mxu0 0.0
    %1590 = vmatpush.msra.mxu0 0.0
    %1591 = vmatpush.msra.mxu0 0.0
    %1592 = vmatpush.msra.mxu0 0.0
    %1593 = vmatpush.msra.mxu0 %v574
    %1594 = vmatpush.msra.mxu0 %v573
    %1595 = vmatpush.msra.mxu0 %v572
    %1596 = vmatpush.msra.mxu0 %v571
    %1597 = vmatmul.f32.gmra.mxu0 %v1579
    %v1598 = vpop.f32.mrf.mxu0
    %v1599 = vadd.f32 0.0, %v1598
    %1600 = vdwg.mxu0
    %v1601 = vadd.f32 %v548, %v1599
    %v1602 = vadd.f32 %v1601, %v628
    %v1603 = vxor.u32 %v1575, 2147483648
    %v1604 = vmul.f32 %v1603, 1.442695
    %v1605 = vpow.pop %v1604
    %v1606 = vadd.f32 %v1605, 1.0
    %v1607 = vrcp.pop %v1606
    %v1608 = vmul.f32 %v1606, %v1607
    %v1609 = vsub.f32 1.0, %v1608
    %v1610 = vmul.f32 %v1607, %v1609
    %v1611 = vadd.f32 %v1607, %v1610
    %vm1612 = vweird.f32 %v1606
    %vm1613 = vweird.f32 %v1607
    %vm1614 = vmor %vm1612, %vm1613
    %v1615 = vsel %vm1614, %v1607, %v1611
    %v1616 = vand.u32 2147483647, %v1606
    %vm1617 = vcmp.eq.f32.partialorder %v1616, 8.507059e+37
    %v1618 = vand.u32 %v1606, 2147483648
    %v1619 = vor.u32 1.1754944e-38, %v1618
    %v1620 = vsel %vm1617, %v1619, %v1615
    %v1621 = vmul.f32 1.0, %v1620
    %v1622 = vtanh.pop %v1575
    %v1623 = vmul.f32 %v1621, %v1546
    %1625 = vrot.lane.b32.xlu0 %v1622, 64
    %v1626 = vpop.permute.xlu0 %1625
    %v1628 = vmul.f32 %v1621, %v1626
    %1630 = vrot.lane.b32.xlu0 %v1628, 32
    %v1631 = vpop.permute.xlu0 %1630
    %v1633 = vadd.f32 %v1623, %v1631
    %v1634 = vtanh.pop %v1633
    %1636 = vrot.lane.b32.xlu0 %v1634, 64
    %v1637 = vpop.permute.xlu0 %1636
    %v1639 = vmul.f32 %v1621, %v1637
    %v1640 = vxor.u32 %v1602, 2147483648
    %v1641 = vmul.f32 %v1640, 1.442695
    %v1642 = vpow.pop %v1641
    %v1643 = vadd.f32 %v1642, 1.0
    %v1644 = vrcp.pop %v1643
    %v1645 = vmul.f32 %v1643, %v1644
    %v1646 = vsub.f32 1.0, %v1645
    %v1647 = vmul.f32 %v1644, %v1646
    %v1648 = vadd.f32 %v1644, %v1647
    %vm1649 = vweird.f32 %v1643
    %vm1650 = vweird.f32 %v1644
    %vm1651 = vmor %vm1649, %vm1650
    %v1652 = vsel %vm1651, %v1644, %v1648
    %v1653 = vand.u32 2147483647, %v1643
    %vm1654 = vcmp.eq.f32.partialorder %v1653, 8.507059e+37
    %v1655 = vand.u32 %v1643, 2147483648
    %v1656 = vor.u32 1.1754944e-38, %v1655
    %v1657 = vsel %vm1654, %v1656, %v1652
    %v1658 = vmul.f32 1.0, %v1657
    %v1659 = vtanh.pop %v1602
    %v1660 = vmul.f32 %v1658, %v1548
    %1662 = vrot.lane.b32.xlu0 %v1659, 64
    %v1663 = vpop.permute.xlu0 %1662
    %v1665 = vmul.f32 %v1658, %v1663
    %1667 = vrot.lane.b32.xlu0 %v1665, 32
    %v1668 = vpop.permute.xlu0 %1667
    %v1670 = vadd.f32 %v1660, %v1668
    %v1671 = vtanh.pop %v1670
    %1673 = vrot.lane.b32.xlu0 %v1671, 64
    %v1674 = vpop.permute.xlu0 %1673
    %v1676 = vmul.f32 %v1658, %v1674
    %v1677 = vsel %vm718, %v1639, %v1545
    %v1678 = vsel %vm711, %v1676, %v1547
    %v1679 = vld [vmem:[%s7] sm:$0xff]
    %v1680 = vld [vmem:[%s7 + $0x8] sm:$0xff]
    %v1681 = vld [vmem:[%s7 + $0x10] sm:$0xff]
    %v1682 = vld [vmem:[%s7 + $0x18] sm:$0xff]
    %v1683 = vld [vmem:[%s8] sm:$0xff]
    %v1684 = vld [vmem:[%s8 + $0x8] sm:$0xff]
    %v1685 = vld [vmem:[%s8 + $0x10] sm:$0xff]
    %v1686 = vld [vmem:[%s8 + $0x18] sm:$0xff]
    %1688 = vrot.lane.b32.xlu0 %v1678, 32
    %v1689 = vpop.permute.xlu0 %1688
    %v1690 = vsel %vm577, %v1689, 0
    %1692 = vmatpush.msra.mxu0 0.0
    %1693 = vmatpush.msra.mxu0 0.0
    %1694 = vmatpush.msra.mxu0 0.0
    %1695 = vmatpush.msra.mxu0 0.0
    %1696 = vmatpush.msra.mxu0 0.0
    %1697 = vmatpush.msra.mxu0 0.0
    %1698 = vmatpush.msra.mxu0 0.0
    %1699 = vmatpush.msra.mxu0 0.0
    %1700 = vmatpush.msra.mxu0 0.0
    %1701 = vmatpush.msra.mxu0 0.0
    %1702 = vmatpush.msra.mxu0 0.0
    %1703 = vmatpush.msra.mxu0 0.0
    %1704 = vmatpush.msra.mxu0 %v1686
    %1705 = vmatpush.msra.mxu0 %v1685
    %1706 = vmatpush.msra.mxu0 %v1684
    %1707 = vmatpush.msra.mxu0 %v1683
    %1708 = vmatmul.f32.gmra.mxu0 %v1690
    %v1709 = vpop.f32.mrf.mxu0
    %v1710 = vadd.f32 0.0, %v1709
    %1711 = vdwg.mxu0
    %1713 = vrot.lane.b32.xlu0 %v1677, 32
    %v1714 = vpop.permute.xlu0 %1713
    %v1715 = vsel %vm577, %v1714, 0
    %1717 = vmatpush.msra.mxu0 0.0
    %1718 = vmatpush.msra.mxu0 0.0
    %1719 = vmatpush.msra.mxu0 0.0
    %1720 = vmatpush.msra.mxu0 0.0
    %1721 = vmatpush.msra.mxu0 0.0
    %1722 = vmatpush.msra.mxu0 0.0
    %1723 = vmatpush.msra.mxu0 0.0
    %1724 = vmatpush.msra.mxu0 0.0
    %1725 = vmatpush.msra.mxu0 0.0
    %1726 = vmatpush.msra.mxu0 0.0
    %1727 = vmatpush.msra.mxu0 0.0
    %1728 = vmatpush.msra.mxu0 0.0
    %1729 = vmatpush.msra.mxu0 %v1682
    %1730 = vmatpush.msra.mxu0 %v1681
    %1731 = vmatpush.msra.mxu0 %v1680
    %1732 = vmatpush.msra.mxu0 %v1679
    %1733 = vmatmul.f32.gmra.mxu0 %v1715
    %v1734 = vpop.f32.mrf.mxu0
    %v1735 = vadd.f32 %v1710, %v1734
    %1736 = vdwg.mxu0
    %v1737 = vld [vmem:[#allocation2] sm:$0x1]
    %v1739 = vperm.slane %v1737, 0
    %v1741 = vadd.f32 %v1735, %v1739
    %v1742 = vxor.u32 %v1741, 2147483648
    %v1743 = vmul.f32 %v1742, 1.442695
    %v1744 = vpow.pop %v1743
    %v1745 = vadd.f32 %v1744, 1.0
    %v1746 = vrcp.pop %v1745
    %v1747 = vmul.f32 %v1745, %v1746
    %v1748 = vsub.f32 1.0, %v1747
    %v1749 = vmul.f32 %v1746, %v1748
    %v1750 = vadd.f32 %v1746, %v1749
    %vm1751 = vweird.f32 %v1745
    %vm1752 = vweird.f32 %v1746
    %vm1753 = vmor %vm1751, %vm1752
    %v1754 = vsel %vm1753, %v1746, %v1750
    %v1755 = vand.u32 2147483647, %v1745
    %vm1756 = vcmp.eq.f32.partialorder %v1755, 8.507059e+37
    %v1757 = vand.u32 %v1745, 2147483648
    %v1758 = vor.u32 1.1754944e-38, %v1757
    %v1759 = vsel %vm1756, %v1758, %v1754
    %v1760 = vmul.f32 1.0, %v1759
    %vm1761 = vcmask 7168
    %1762 = vst.msk [vmem:[%s10] sm:$0xff] %vm1761, %v1760
    // Predicated region
    $region50: #{tpu_custom_call.1} parent=1 // pred_check
      _
    $region51: #{tpu_custom_call.1} parent=1 // pred_check_branch
      %1764 = sbr.rel (0) target = $region53
    $region52: #{tpu_custom_call.1} parent=1 // pred_region
      _
    $region53: #{tpu_custom_call.1} parent=1 // pred_fallthru
      _
    // Predicated region
    $region54: #{tpu_custom_call.1} parent=1 // pred_check
      _
    $region55: #{tpu_custom_call.1} parent=1 // pred_check_branch
      %1766 = sbr.rel (0) target = $region57
    $region56: #{tpu_custom_call.1} parent=1 // pred_region
      _
    $region57: #{tpu_custom_call.1} parent=1 // pred_fallthru
      _
    %1767 = vsyncpa [#allocation4], 1
    %1768 = vsyncpa [#allocation6], 1

</llo_original>
